<compile_context>
chip_gen: v5e
topology: v5e:2x2
jax: 0.10.0
libtpu: 0.0.40
codegen_flags: <defaults>
</compile_context>

<pallas_src>
import jax
import jax.numpy as jnp
from jax import lax
from jax.experimental import pallas as pl
from jax.experimental.pallas import tpu as pltpu


_LANE = 128


def _round_up(v, m):
    return ((v + m - 1) // m) * m


def _make_kernel(num_layers: int, seq_len: int, batch_tile: int, hidden_p: int):
    """Kernel body for a fixed (layers, T, batch-tile, padded-hidden) config."""

    def kernel(*refs):
        # ---- unpack refs ------------------------------------------------------
        idx = 0
        x_ref = refs[idx]; idx += 1                       # (T, Bt, Ip) time-major
        layer_refs = []
        for _ in range(num_layers):
            layer_refs.append(refs[idx:idx + 3])          # (w_ih_t, w_hh_t, b_fused)
            idx += 3
        w_mid_ref, b_mid_ref, w_cls_ref, b_cls_ref = refs[idx:idx + 4]; idx += 4
        mid_out_ref, cls_out_ref = refs[idx:idx + 2]

        cdt = x_ref.dtype                                 # compute dtype (bf16 or f32)

        # Hoist weight loads and the bias broadcast out of the time loop
        # (JAX does not CSE broadcast_in_dim; pre-broadcast once).
        layer_w = []
        for (w_ih_ref, w_hh_ref, b_ref) in layer_refs:
            b_full = jnp.broadcast_to(
                b_ref[...].astype(jnp.float32), (batch_tile, hidden_p))
            layer_w.append((w_ih_ref[...], w_hh_ref[...], b_full))

        # ---- recurrence as an in-kernel loop, h carried in vregs ---------------
        def step(t, hs):
            inp = x_ref[t]                                # (Bt, in_p) dyn. leading index
            new_hs = []
            for l, (w_ih, w_hh, b_full) in enumerate(layer_w):
                # Two small-K MXU pushes instead of a per-step concat+matmul;
                # both accumulate in f32.
                pre = (
                    jnp.dot(inp, w_ih, preferred_element_type=jnp.float32)
                    + jnp.dot(hs[l], w_hh, preferred_element_type=jnp.float32)
                    + b_full
                )
                h_new = jnp.tanh(pre).astype(cdt)
                new_hs.append(h_new)
                inp = h_new
            return tuple(new_hs)

        init = tuple(
            jnp.zeros((batch_tile, hidden_p), cdt) for _ in range(num_layers)
        )
        # Bounded unroll: full unroll only for small static T.
        unroll = True if seq_len <= 16 else 4
        hs = lax.fori_loop(0, seq_len, step, init, unroll=unroll)

        # ---- heads run once, after the loop (out[:, -1, :] -> mid -> classes) -
        last = hs[num_layers - 1]
        mid_f32 = (
            jnp.dot(last, w_mid_ref[...], preferred_element_type=jnp.float32)
            + b_mid_ref[...].astype(jnp.float32)
        )
        mid_out_ref[...] = mid_f32
        cls_out_ref[...] = (
            jnp.dot(mid_f32.astype(w_cls_ref.dtype), w_cls_ref[...],
                    preferred_element_type=jnp.float32)
            + b_cls_ref[...].astype(jnp.float32)
        )

    return kernel


def rnn_joint_forward(x, params, *, num_layers, hidden_size, num_mid, num_classes,
                      compute_dtype=jnp.bfloat16, batch_tile=None):
    """Pallas implementation of RNNJoint.forward.

    x:      (B, T, I) float32, batch_first like PyTorch.
    params: dict with per-layer RNN weights (PyTorch (out, in) layout) and the
            two Linear heads.
    returns (mid, classes): (B, num_mid), (B, num_classes), float32.
    """
    B, T, I = x.shape
    H = hidden_size

    cdt = jnp.dtype(compute_dtype)
    sublane = 16 if cdt.itemsize == 2 else 8

    # Lane-dense padding (last dims -> multiples of 128) and sublane-aligned batch.
    Ip = _round_up(max(I, 1), _LANE)
    Hp = _round_up(H, _LANE)
    Mp = _round_up(num_mid, _LANE)
    Cp = _round_up(num_classes, _LANE)
    Bp = _round_up(max(B, sublane), sublane)

    if batch_tile is None:
        batch_tile = min(Bp, 256)       # shard bigger batches across v7x's 2 TCs
    batch_tile = max(sublane, _round_up(batch_tile, sublane))
    Bp = _round_up(Bp, batch_tile)
    n_tiles = Bp // batch_tile

    # TODO(synk): if the producer can emit time-major x, drop this transpose —
    # it is a full extra HBM relayout executed as a separate XLA op.
    x_tbi = jnp.transpose(x, (1, 0, 2))                    # (T, B, I)
    x_tbi = jnp.pad(x_tbi, ((0, 0), (0, Bp - B), (0, Ip - I))).astype(cdt)

    def pad2(a, r, c):
        return jnp.pad(a, ((0, r - a.shape[0]), (0, c - a.shape[1])))

    const_map = lambda b: (0, 0)
    inputs = [x_tbi]
    in_specs = [pl.BlockSpec((T, batch_tile, Ip), lambda b: (0, b, 0))]

    for l in range(num_layers):
        in_p = Ip if l == 0 else Hp
        # Pre-transposed, zero-padded weights (padded rows/cols are zero so they
        # contribute nothing; padded hidden lanes stay exactly 0 through tanh(0)).
        w_ih_t = pad2(params[f"w_ih_{l}"].T, in_p, Hp).astype(cdt)
        w_hh_t = pad2(params[f"w_hh_{l}"].T, Hp, Hp).astype(cdt)
        b_fused = jnp.pad(
            (params[f"b_ih_{l}"] + params[f"b_hh_{l}"]).reshape(1, H),
            ((0, 0), (0, Hp - H)),
        ).astype(jnp.float32)
        inputs += [w_ih_t, w_hh_t, b_fused]
        in_specs += [
            pl.BlockSpec((in_p, Hp), const_map),
            pl.BlockSpec((Hp, Hp), const_map),
            pl.BlockSpec((1, Hp), const_map),
        ]

    w_mid_t = pad2(params["w_mid"].T, Hp, Mp).astype(cdt)
    b_mid = jnp.pad(params["b_mid"].reshape(1, -1),
                    ((0, 0), (0, Mp - num_mid))).astype(jnp.float32)
    w_cls_t = pad2(params["w_cls"].T, Mp, Cp).astype(cdt)
    b_cls = jnp.pad(params["b_cls"].reshape(1, -1),
                    ((0, 0), (0, Cp - num_classes))).astype(jnp.float32)
    inputs += [w_mid_t, b_mid, w_cls_t, b_cls]
    in_specs += [
        pl.BlockSpec((Hp, Mp), const_map),
        pl.BlockSpec((1, Mp), const_map),
        pl.BlockSpec((Mp, Cp), const_map),
        pl.BlockSpec((1, Cp), const_map),
    ]

    out_specs = (
        pl.BlockSpec((batch_tile, Mp), lambda b: (b, 0)),
        pl.BlockSpec((batch_tile, Cp), lambda b: (b, 0)),
    )
    out_shape = (
        jax.ShapeDtypeStruct((Bp, Mp), jnp.float32),       # lane-dense outputs
        jax.ShapeDtypeStruct((Bp, Cp), jnp.float32),
    )

    # VMEM budget: resident x slab (per batch tile) + weights + outputs,
    # x2 for double buffering, plus slack for temporaries.
    x_block_bytes = T * batch_tile * Ip * cdt.itemsize
    weight_bytes = sum(int(a.size) * a.dtype.itemsize for a in inputs[1:])
    out_bytes = batch_tile * (Mp + Cp) * 4
    needed = 2 * (x_block_bytes + weight_bytes + out_bytes) + (4 << 20)
    vmem_limit = int(min(64 << 20, max(needed, 8 << 20)))
    # TODO(synk): if `needed` approaches half of physical VMEM (64 MiB on v7x),
    # chunk the time axis (grid over T-chunks marked "arbitrary" with h carried
    # in VMEM scratch) instead of keeping the whole (T, Bp, Ip) slab resident.

    kernel = _make_kernel(num_layers, T, batch_tile, Hp)

    mid_p, cls_p = pl.pallas_call(
        kernel,
        grid=(n_tiles,),
        out_shape=out_shape,
        in_specs=in_specs,
        out_specs=out_specs,
        compiler_params=pltpu.CompilerParams(
            dimension_semantics=("parallel",),   # batch tiles shard over v7x's 2 TCs
            vmem_limit_bytes=vmem_limit,
        ),
    )(*inputs)

    return mid_p[:B, :num_mid], cls_p[:B, :num_classes]


# ------------------------- pure-JAX reference ---------------------------------
def rnn_joint_reference(x, params, *, num_layers, hidden_size):
    B, T, _ = x.shape
    h = [jnp.zeros((B, hidden_size), jnp.float32) for _ in range(num_layers)]
    for t in range(T):
        inp = x[:, t, :]
        for l in range(num_layers):
            pre = (
                inp @ params[f"w_ih_{l}"].T
                + params[f"b_ih_{l}"]
                + h[l] @ params[f"w_hh_{l}"].T
                + params[f"b_hh_{l}"]
            )
            h[l] = jnp.tanh(pre)
            inp = h[l]
    last = h[num_layers - 1]
    mid = last @ params["w_mid"].T + params["b_mid"]
    classes = mid @ params["w_cls"].T + params["b_cls"]
    return mid, classes


# ------------------------------- driver ----------------------------------------
def init_params(key, *, input_size, hidden_size, num_layers, num_mid, num_classes):
    """Deterministic init mimicking PyTorch's uniform(-1/sqrt(H), 1/sqrt(H))."""
    params = {}
    bound_rnn = 1.0 / jnp.sqrt(hidden_size)

    def uni(k, shape, bound):
        return jax.random.uniform(k, shape, jnp.float32, -bound, bound)

    keys = jax.random.split(key, 4 * num_layers + 4)
    ki = 0
    for l in range(num_layers):
        in_dim = input_size if l == 0 else hidden_size
        params[f"w_ih_{l}"] = uni(keys[ki], (hidden_size, in_dim), bound_rnn); ki += 1
        params[f"w_hh_{l}"] = uni(keys[ki], (hidden_size, hidden_size), bound_rnn); ki += 1
        params[f"b_ih_{l}"] = uni(keys[ki], (hidden_size,), bound_rnn); ki += 1
        params[f"b_hh_{l}"] = uni(keys[ki], (hidden_size,), bound_rnn); ki += 1

    bound_mid = 1.0 / jnp.sqrt(hidden_size)
    params["w_mid"] = uni(keys[ki], (num_mid, hidden_size), bound_mid); ki += 1
    params["b_mid"] = uni(keys[ki], (num_mid,), bound_mid); ki += 1
    bound_cls = 1.0 / jnp.sqrt(num_mid)
    params["w_cls"] = uni(keys[ki], (num_classes, num_mid), bound_cls); ki += 1
    params["b_cls"] = uni(keys[ki], (num_classes,), bound_cls); ki += 1
    return params


if __name__ == "__main__":
    # Small shapes implied by the forward: x is (batch, seq, input_size).
    input_size = 8
    hidden_size = 32
    num_layers = 2
    num_mid = 16
    num_classes = 4
    batch = 2
    seq = 8

    key = jax.random.PRNGKey(0)
    k_x, k_p = jax.random.split(key)
    x = jax.random.normal(k_x, (batch, seq, input_size), jnp.float32)
    params = init_params(
        k_p,
        input_size=input_size,
        hidden_size=hidden_size,
        num_layers=num_layers,
        num_mid=num_mid,
        num_classes=num_classes,
    )

    mid_ref, cls_ref = rnn_joint_reference(
        x, params, num_layers=num_layers, hidden_size=hidden_size
    )

    # f32 compute path: bitwise-faithful to the PyTorch f32 forward.
    mid32, cls32 = jax.block_until_ready(
        rnn_joint_forward(
            x, params, num_layers=num_layers, hidden_size=hidden_size,
            num_mid=num_mid, num_classes=num_classes,
            compute_dtype=jnp.float32,
        )
    )
    assert mid32.shape == (batch, num_mid)
    assert cls32.shape == (batch, num_classes)
    assert jnp.allclose(mid32, mid_ref, atol=1e-5, rtol=1e-5)
    assert jnp.allclose(cls32, cls_ref, atol=1e-5, rtol=1e-5)

    # bf16 compute path (default): bf16 MXU rate + half the VMEM footprint,
    # f32 accumulation; numerically a close approximation.
    midbf, clsbf = jax.block_until_ready(
        rnn_joint_forward(
            x, params, num_layers=num_layers, hidden_size=hidden_size,
            num_mid=num_mid, num_classes=num_classes,
            compute_dtype=jnp.bfloat16,
        )
    )
    assert midbf.shape == (batch, num_mid)
    assert clsbf.shape == (batch, num_classes)
    assert jnp.allclose(midbf, mid_ref, atol=5e-2, rtol=5e-2)
    assert jnp.allclose(clsbf, cls_ref, atol=5e-2, rtol=5e-2)

    print("KERNEL_OK")
</pallas_src>

<mosaic_0001>
module attributes {stable_mosaic.version = 11 : i64} {
  func.func @kernel(%arg0: i32, %arg1: memref<8x8x128xf32, #tpu.memory_space<vmem>>, %arg2: memref<128x128xf32, #tpu.memory_space<vmem>>, %arg3: memref<128x128xf32, #tpu.memory_space<vmem>>, %arg4: memref<1x128xf32, #tpu.memory_space<vmem>>, %arg5: memref<128x128xf32, #tpu.memory_space<vmem>>, %arg6: memref<128x128xf32, #tpu.memory_space<vmem>>, %arg7: memref<1x128xf32, #tpu.memory_space<vmem>>, %arg8: memref<128x128xf32, #tpu.memory_space<vmem>>, %arg9: memref<1x128xf32, #tpu.memory_space<vmem>>, %arg10: memref<128x128xf32, #tpu.memory_space<vmem>>, %arg11: memref<1x128xf32, #tpu.memory_space<vmem>>, %arg12: memref<8x128xf32, #tpu.memory_space<vmem>>, %arg13: memref<8x128xf32, #tpu.memory_space<vmem>>) attributes {dimension_semantics = [#tpu.dimension_semantics<parallel>], iteration_bounds = array<i64: 1>, scalar_prefetch = 0 : i64, scratch_operands = 0 : i64, tpu.core_type = #tpu.core_type<tc>, window_params = [{transform_indices = @transform_0, window_bounds = array<i64: 8, 8, 128>}, {pipeline_mode = #tpu.pipeline_mode<synchronous>, transform_indices = @transform_1, window_bounds = array<i64: 128, 128>}, {pipeline_mode = #tpu.pipeline_mode<synchronous>, transform_indices = @transform_2, window_bounds = array<i64: 128, 128>}, {pipeline_mode = #tpu.pipeline_mode<synchronous>, transform_indices = @transform_3, window_bounds = array<i64: 1, 128>}, {pipeline_mode = #tpu.pipeline_mode<synchronous>, transform_indices = @transform_4, window_bounds = array<i64: 128, 128>}, {pipeline_mode = #tpu.pipeline_mode<synchronous>, transform_indices = @transform_5, window_bounds = array<i64: 128, 128>}, {pipeline_mode = #tpu.pipeline_mode<synchronous>, transform_indices = @transform_6, window_bounds = array<i64: 1, 128>}, {pipeline_mode = #tpu.pipeline_mode<synchronous>, transform_indices = @transform_7, window_bounds = array<i64: 128, 128>}, {pipeline_mode = #tpu.pipeline_mode<synchronous>, transform_indices = @transform_8, window_bounds = array<i64: 1, 128>}, {pipeline_mode = #tpu.pipeline_mode<synchronous>, transform_indices = @transform_9, window_bounds = array<i64: 128, 128>}, {pipeline_mode = #tpu.pipeline_mode<synchronous>, transform_indices = @transform_10, window_bounds = array<i64: 1, 128>}, {transform_indices = @transform_11, window_bounds = array<i64: 8, 128>}, {transform_indices = @transform_12, window_bounds = array<i64: 8, 128>}]} {
    %c0 = arith.constant 0 : index
    %c0_0 = arith.constant 0 : index
    %0 = vector.load %arg4[%c0, %c0_0] : memref<1x128xf32, #tpu.memory_space<vmem>>, vector<1x128xf32>
    %1 = vector.shape_cast %0 : vector<1x128xf32> to vector<1x128xf32>
    %2 = vector.broadcast %1 : vector<1x128xf32> to vector<8x128xf32>
    %c0_1 = arith.constant 0 : index
    %c0_2 = arith.constant 0 : index
    %3 = vector.load %arg2[%c0_1, %c0_2] : memref<128x128xf32, #tpu.memory_space<vmem>>, vector<128x128xf32>
    %c0_3 = arith.constant 0 : index
    %c0_4 = arith.constant 0 : index
    %4 = vector.load %arg3[%c0_3, %c0_4] : memref<128x128xf32, #tpu.memory_space<vmem>>, vector<128x128xf32>
    %c0_5 = arith.constant 0 : index
    %c0_6 = arith.constant 0 : index
    %5 = vector.load %arg7[%c0_5, %c0_6] : memref<1x128xf32, #tpu.memory_space<vmem>>, vector<1x128xf32>
    %6 = vector.shape_cast %5 : vector<1x128xf32> to vector<1x128xf32>
    %7 = vector.broadcast %6 : vector<1x128xf32> to vector<8x128xf32>
    %c0_7 = arith.constant 0 : index
    %c0_8 = arith.constant 0 : index
    %8 = vector.load %arg5[%c0_7, %c0_8] : memref<128x128xf32, #tpu.memory_space<vmem>>, vector<128x128xf32>
    %c0_9 = arith.constant 0 : index
    %c0_10 = arith.constant 0 : index
    %9 = vector.load %arg6[%c0_9, %c0_10] : memref<128x128xf32, #tpu.memory_space<vmem>>, vector<128x128xf32>
    %cst = arith.constant 0.000000e+00 : f32
    %10 = vector.broadcast %cst : f32 to vector<8x128xf32>
    %cst_11 = arith.constant 0.000000e+00 : f32
    %11 = vector.broadcast %cst_11 : f32 to vector<8x128xf32>
    %c0_i32 = arith.constant 0 : i32
    %12 = arith.index_cast %c0_i32 : i32 to index
    %c0_12 = arith.constant 0 : index
    %c0_13 = arith.constant 0 : index
    %13 = vector.load %arg1[%12, %c0_12, %c0_13] : memref<8x8x128xf32, #tpu.memory_space<vmem>>, vector<1x8x128xf32>
    %14 = vector.shape_cast %13 : vector<1x8x128xf32> to vector<8x128xf32>
    %cst_14 = arith.constant dense<0.000000e+00> : vector<8x128xf32>
    %15 = tpu.matmul %14, %3, %cst_14 {dimension_numbers = #tpu.dot_dimension_numbers<[1], [0], [0], [1], [0, 0, 1, 1], [], []>} : vector<8x128xf32>, vector<128x128xf32>, vector<8x128xf32> -> vector<8x128xf32>
    %cst_15 = arith.constant dense<0.000000e+00> : vector<8x128xf32>
    %16 = tpu.matmul %10, %4, %cst_15 {dimension_numbers = #tpu.dot_dimension_numbers<[1], [0], [0], [1], [0, 0, 1, 1], [], []>} : vector<8x128xf32>, vector<128x128xf32>, vector<8x128xf32> -> vector<8x128xf32>
    %17 = arith.addf %15, %16 : vector<8x128xf32>
    %18 = arith.addf %17, %2 : vector<8x128xf32>
    %19 = math.tanh %18 : vector<8x128xf32>
    %cst_16 = arith.constant dense<0.000000e+00> : vector<8x128xf32>
    %20 = tpu.matmul %19, %8, %cst_16 {dimension_numbers = #tpu.dot_dimension_numbers<[1], [0], [0], [1], [0, 0, 1, 1], [], []>} : vector<8x128xf32>, vector<128x128xf32>, vector<8x128xf32> -> vector<8x128xf32>
    %cst_17 = arith.constant dense<0.000000e+00> : vector<8x128xf32>
    %21 = tpu.matmul %11, %9, %cst_17 {dimension_numbers = #tpu.dot_dimension_numbers<[1], [0], [0], [1], [0, 0, 1, 1], [], []>} : vector<8x128xf32>, vector<128x128xf32>, vector<8x128xf32> -> vector<8x128xf32>
    %22 = arith.addf %20, %21 : vector<8x128xf32>
    %23 = arith.addf %22, %7 : vector<8x128xf32>
    %24 = math.tanh %23 : vector<8x128xf32>
    %c1_i32 = arith.constant 1 : i32
    %25 = arith.index_cast %c1_i32 : i32 to index
    %c0_18 = arith.constant 0 : index
    %c0_19 = arith.constant 0 : index
    %26 = vector.load %arg1[%25, %c0_18, %c0_19] : memref<8x8x128xf32, #tpu.memory_space<vmem>>, vector<1x8x128xf32>
    %27 = vector.shape_cast %26 : vector<1x8x128xf32> to vector<8x128xf32>
    %cst_20 = arith.constant dense<0.000000e+00> : vector<8x128xf32>
    %28 = tpu.matmul %27, %3, %cst_20 {dimension_numbers = #tpu.dot_dimension_numbers<[1], [0], [0], [1], [0, 0, 1, 1], [], []>} : vector<8x128xf32>, vector<128x128xf32>, vector<8x128xf32> -> vector<8x128xf32>
    %cst_21 = arith.constant dense<0.000000e+00> : vector<8x128xf32>
    %29 = tpu.matmul %19, %4, %cst_21 {dimension_numbers = #tpu.dot_dimension_numbers<[1], [0], [0], [1], [0, 0, 1, 1], [], []>} : vector<8x128xf32>, vector<128x128xf32>, vector<8x128xf32> -> vector<8x128xf32>
    %30 = arith.addf %28, %29 : vector<8x128xf32>
    %31 = arith.addf %30, %2 : vector<8x128xf32>
    %32 = math.tanh %31 : vector<8x128xf32>
    %cst_22 = arith.constant dense<0.000000e+00> : vector<8x128xf32>
    %33 = tpu.matmul %32, %8, %cst_22 {dimension_numbers = #tpu.dot_dimension_numbers<[1], [0], [0], [1], [0, 0, 1, 1], [], []>} : vector<8x128xf32>, vector<128x128xf32>, vector<8x128xf32> -> vector<8x128xf32>
    %cst_23 = arith.constant dense<0.000000e+00> : vector<8x128xf32>
    %34 = tpu.matmul %24, %9, %cst_23 {dimension_numbers = #tpu.dot_dimension_numbers<[1], [0], [0], [1], [0, 0, 1, 1], [], []>} : vector<8x128xf32>, vector<128x128xf32>, vector<8x128xf32> -> vector<8x128xf32>
    %35 = arith.addf %33, %34 : vector<8x128xf32>
    %36 = arith.addf %35, %7 : vector<8x128xf32>
    %37 = math.tanh %36 : vector<8x128xf32>
    %c2_i32 = arith.constant 2 : i32
    %38 = arith.index_cast %c2_i32 : i32 to index
    %c0_24 = arith.constant 0 : index
    %c0_25 = arith.constant 0 : index
    %39 = vector.load %arg1[%38, %c0_24, %c0_25] : memref<8x8x128xf32, #tpu.memory_space<vmem>>, vector<1x8x128xf32>
    %40 = vector.shape_cast %39 : vector<1x8x128xf32> to vector<8x128xf32>
    %cst_26 = arith.constant dense<0.000000e+00> : vector<8x128xf32>
    %41 = tpu.matmul %40, %3, %cst_26 {dimension_numbers = #tpu.dot_dimension_numbers<[1], [0], [0], [1], [0, 0, 1, 1], [], []>} : vector<8x128xf32>, vector<128x128xf32>, vector<8x128xf32> -> vector<8x128xf32>
    %cst_27 = arith.constant dense<0.000000e+00> : vector<8x128xf32>
    %42 = tpu.matmul %32, %4, %cst_27 {dimension_numbers = #tpu.dot_dimension_numbers<[1], [0], [0], [1], [0, 0, 1, 1], [], []>} : vector<8x128xf32>, vector<128x128xf32>, vector<8x128xf32> -> vector<8x128xf32>
    %43 = arith.addf %41, %42 : vector<8x128xf32>
    %44 = arith.addf %43, %2 : vector<8x128xf32>
    %45 = math.tanh %44 : vector<8x128xf32>
    %cst_28 = arith.constant dense<0.000000e+00> : vector<8x128xf32>
    %46 = tpu.matmul %45, %8, %cst_28 {dimension_numbers = #tpu.dot_dimension_numbers<[1], [0], [0], [1], [0, 0, 1, 1], [], []>} : vector<8x128xf32>, vector<128x128xf32>, vector<8x128xf32> -> vector<8x128xf32>
    %cst_29 = arith.constant dense<0.000000e+00> : vector<8x128xf32>
    %47 = tpu.matmul %37, %9, %cst_29 {dimension_numbers = #tpu.dot_dimension_numbers<[1], [0], [0], [1], [0, 0, 1, 1], [], []>} : vector<8x128xf32>, vector<128x128xf32>, vector<8x128xf32> -> vector<8x128xf32>
    %48 = arith.addf %46, %47 : vector<8x128xf32>
    %49 = arith.addf %48, %7 : vector<8x128xf32>
    %50 = math.tanh %49 : vector<8x128xf32>
    %c3_i32 = arith.constant 3 : i32
    %51 = arith.index_cast %c3_i32 : i32 to index
    %c0_30 = arith.constant 0 : index
    %c0_31 = arith.constant 0 : index
    %52 = vector.load %arg1[%51, %c0_30, %c0_31] : memref<8x8x128xf32, #tpu.memory_space<vmem>>, vector<1x8x128xf32>
    %53 = vector.shape_cast %52 : vector<1x8x128xf32> to vector<8x128xf32>
    %cst_32 = arith.constant dense<0.000000e+00> : vector<8x128xf32>
    %54 = tpu.matmul %53, %3, %cst_32 {dimension_numbers = #tpu.dot_dimension_numbers<[1], [0], [0], [1], [0, 0, 1, 1], [], []>} : vector<8x128xf32>, vector<128x128xf32>, vector<8x128xf32> -> vector<8x128xf32>
    %cst_33 = arith.constant dense<0.000000e+00> : vector<8x128xf32>
    %55 = tpu.matmul %45, %4, %cst_33 {dimension_numbers = #tpu.dot_dimension_numbers<[1], [0], [0], [1], [0, 0, 1, 1], [], []>} : vector<8x128xf32>, vector<128x128xf32>, vector<8x128xf32> -> vector<8x128xf32>
    %56 = arith.addf %54, %55 : vector<8x128xf32>
    %57 = arith.addf %56, %2 : vector<8x128xf32>
    %58 = math.tanh %57 : vector<8x128xf32>
    %cst_34 = arith.constant dense<0.000000e+00> : vector<8x128xf32>
    %59 = tpu.matmul %58, %8, %cst_34 {dimension_numbers = #tpu.dot_dimension_numbers<[1], [0], [0], [1], [0, 0, 1, 1], [], []>} : vector<8x128xf32>, vector<128x128xf32>, vector<8x128xf32> -> vector<8x128xf32>
    %cst_35 = arith.constant dense<0.000000e+00> : vector<8x128xf32>
    %60 = tpu.matmul %50, %9, %cst_35 {dimension_numbers = #tpu.dot_dimension_numbers<[1], [0], [0], [1], [0, 0, 1, 1], [], []>} : vector<8x128xf32>, vector<128x128xf32>, vector<8x128xf32> -> vector<8x128xf32>
    %61 = arith.addf %59, %60 : vector<8x128xf32>
    %62 = arith.addf %61, %7 : vector<8x128xf32>
    %63 = math.tanh %62 : vector<8x128xf32>
    %c4_i32 = arith.constant 4 : i32
    %64 = arith.index_cast %c4_i32 : i32 to index
    %c0_36 = arith.constant 0 : index
    %c0_37 = arith.constant 0 : index
    %65 = vector.load %arg1[%64, %c0_36, %c0_37] : memref<8x8x128xf32, #tpu.memory_space<vmem>>, vector<1x8x128xf32>
    %66 = vector.shape_cast %65 : vector<1x8x128xf32> to vector<8x128xf32>
    %cst_38 = arith.constant dense<0.000000e+00> : vector<8x128xf32>
    %67 = tpu.matmul %66, %3, %cst_38 {dimension_numbers = #tpu.dot_dimension_numbers<[1], [0], [0], [1], [0, 0, 1, 1], [], []>} : vector<8x128xf32>, vector<128x128xf32>, vector<8x128xf32> -> vector<8x128xf32>
    %cst_39 = arith.constant dense<0.000000e+00> : vector<8x128xf32>
    %68 = tpu.matmul %58, %4, %cst_39 {dimension_numbers = #tpu.dot_dimension_numbers<[1], [0], [0], [1], [0, 0, 1, 1], [], []>} : vector<8x128xf32>, vector<128x128xf32>, vector<8x128xf32> -> vector<8x128xf32>
    %69 = arith.addf %67, %68 : vector<8x128xf32>
    %70 = arith.addf %69, %2 : vector<8x128xf32>
    %71 = math.tanh %70 : vector<8x128xf32>
    %cst_40 = arith.constant dense<0.000000e+00> : vector<8x128xf32>
    %72 = tpu.matmul %71, %8, %cst_40 {dimension_numbers = #tpu.dot_dimension_numbers<[1], [0], [0], [1], [0, 0, 1, 1], [], []>} : vector<8x128xf32>, vector<128x128xf32>, vector<8x128xf32> -> vector<8x128xf32>
    %cst_41 = arith.constant dense<0.000000e+00> : vector<8x128xf32>
    %73 = tpu.matmul %63, %9, %cst_41 {dimension_numbers = #tpu.dot_dimension_numbers<[1], [0], [0], [1], [0, 0, 1, 1], [], []>} : vector<8x128xf32>, vector<128x128xf32>, vector<8x128xf32> -> vector<8x128xf32>
    %74 = arith.addf %72, %73 : vector<8x128xf32>
    %75 = arith.addf %74, %7 : vector<8x128xf32>
    %76 = math.tanh %75 : vector<8x128xf32>
    %c5_i32 = arith.constant 5 : i32
    %77 = arith.index_cast %c5_i32 : i32 to index
    %c0_42 = arith.constant 0 : index
    %c0_43 = arith.constant 0 : index
    %78 = vector.load %arg1[%77, %c0_42, %c0_43] : memref<8x8x128xf32, #tpu.memory_space<vmem>>, vector<1x8x128xf32>
    %79 = vector.shape_cast %78 : vector<1x8x128xf32> to vector<8x128xf32>
    %cst_44 = arith.constant dense<0.000000e+00> : vector<8x128xf32>
    %80 = tpu.matmul %79, %3, %cst_44 {dimension_numbers = #tpu.dot_dimension_numbers<[1], [0], [0], [1], [0, 0, 1, 1], [], []>} : vector<8x128xf32>, vector<128x128xf32>, vector<8x128xf32> -> vector<8x128xf32>
    %cst_45 = arith.constant dense<0.000000e+00> : vector<8x128xf32>
    %81 = tpu.matmul %71, %4, %cst_45 {dimension_numbers = #tpu.dot_dimension_numbers<[1], [0], [0], [1], [0, 0, 1, 1], [], []>} : vector<8x128xf32>, vector<128x128xf32>, vector<8x128xf32> -> vector<8x128xf32>
    %82 = arith.addf %80, %81 : vector<8x128xf32>
    %83 = arith.addf %82, %2 : vector<8x128xf32>
    %84 = math.tanh %83 : vector<8x128xf32>
    %cst_46 = arith.constant dense<0.000000e+00> : vector<8x128xf32>
    %85 = tpu.matmul %84, %8, %cst_46 {dimension_numbers = #tpu.dot_dimension_numbers<[1], [0], [0], [1], [0, 0, 1, 1], [], []>} : vector<8x128xf32>, vector<128x128xf32>, vector<8x128xf32> -> vector<8x128xf32>
    %cst_47 = arith.constant dense<0.000000e+00> : vector<8x128xf32>
    %86 = tpu.matmul %76, %9, %cst_47 {dimension_numbers = #tpu.dot_dimension_numbers<[1], [0], [0], [1], [0, 0, 1, 1], [], []>} : vector<8x128xf32>, vector<128x128xf32>, vector<8x128xf32> -> vector<8x128xf32>
    %87 = arith.addf %85, %86 : vector<8x128xf32>
    %88 = arith.addf %87, %7 : vector<8x128xf32>
    %89 = math.tanh %88 : vector<8x128xf32>
    %c6_i32 = arith.constant 6 : i32
    %90 = arith.index_cast %c6_i32 : i32 to index
    %c0_48 = arith.constant 0 : index
    %c0_49 = arith.constant 0 : index
    %91 = vector.load %arg1[%90, %c0_48, %c0_49] : memref<8x8x128xf32, #tpu.memory_space<vmem>>, vector<1x8x128xf32>
    %92 = vector.shape_cast %91 : vector<1x8x128xf32> to vector<8x128xf32>
    %cst_50 = arith.constant dense<0.000000e+00> : vector<8x128xf32>
    %93 = tpu.matmul %92, %3, %cst_50 {dimension_numbers = #tpu.dot_dimension_numbers<[1], [0], [0], [1], [0, 0, 1, 1], [], []>} : vector<8x128xf32>, vector<128x128xf32>, vector<8x128xf32> -> vector<8x128xf32>
    %cst_51 = arith.constant dense<0.000000e+00> : vector<8x128xf32>
    %94 = tpu.matmul %84, %4, %cst_51 {dimension_numbers = #tpu.dot_dimension_numbers<[1], [0], [0], [1], [0, 0, 1, 1], [], []>} : vector<8x128xf32>, vector<128x128xf32>, vector<8x128xf32> -> vector<8x128xf32>
    %95 = arith.addf %93, %94 : vector<8x128xf32>
    %96 = arith.addf %95, %2 : vector<8x128xf32>
    %97 = math.tanh %96 : vector<8x128xf32>
    %cst_52 = arith.constant dense<0.000000e+00> : vector<8x128xf32>
    %98 = tpu.matmul %97, %8, %cst_52 {dimension_numbers = #tpu.dot_dimension_numbers<[1], [0], [0], [1], [0, 0, 1, 1], [], []>} : vector<8x128xf32>, vector<128x128xf32>, vector<8x128xf32> -> vector<8x128xf32>
    %cst_53 = arith.constant dense<0.000000e+00> : vector<8x128xf32>
    %99 = tpu.matmul %89, %9, %cst_53 {dimension_numbers = #tpu.dot_dimension_numbers<[1], [0], [0], [1], [0, 0, 1, 1], [], []>} : vector<8x128xf32>, vector<128x128xf32>, vector<8x128xf32> -> vector<8x128xf32>
    %100 = arith.addf %98, %99 : vector<8x128xf32>
    %101 = arith.addf %100, %7 : vector<8x128xf32>
    %102 = math.tanh %101 : vector<8x128xf32>
    %c7_i32 = arith.constant 7 : i32
    %103 = arith.index_cast %c7_i32 : i32 to index
    %c0_54 = arith.constant 0 : index
    %c0_55 = arith.constant 0 : index
    %104 = vector.load %arg1[%103, %c0_54, %c0_55] : memref<8x8x128xf32, #tpu.memory_space<vmem>>, vector<1x8x128xf32>
    %105 = vector.shape_cast %104 : vector<1x8x128xf32> to vector<8x128xf32>
    %cst_56 = arith.constant dense<0.000000e+00> : vector<8x128xf32>
    %106 = tpu.matmul %105, %3, %cst_56 {dimension_numbers = #tpu.dot_dimension_numbers<[1], [0], [0], [1], [0, 0, 1, 1], [], []>} : vector<8x128xf32>, vector<128x128xf32>, vector<8x128xf32> -> vector<8x128xf32>
    %cst_57 = arith.constant dense<0.000000e+00> : vector<8x128xf32>
    %107 = tpu.matmul %97, %4, %cst_57 {dimension_numbers = #tpu.dot_dimension_numbers<[1], [0], [0], [1], [0, 0, 1, 1], [], []>} : vector<8x128xf32>, vector<128x128xf32>, vector<8x128xf32> -> vector<8x128xf32>
    %108 = arith.addf %106, %107 : vector<8x128xf32>
    %109 = arith.addf %108, %2 : vector<8x128xf32>
    %110 = math.tanh %109 : vector<8x128xf32>
    %cst_58 = arith.constant dense<0.000000e+00> : vector<8x128xf32>
    %111 = tpu.matmul %110, %8, %cst_58 {dimension_numbers = #tpu.dot_dimension_numbers<[1], [0], [0], [1], [0, 0, 1, 1], [], []>} : vector<8x128xf32>, vector<128x128xf32>, vector<8x128xf32> -> vector<8x128xf32>
    %cst_59 = arith.constant dense<0.000000e+00> : vector<8x128xf32>
    %112 = tpu.matmul %102, %9, %cst_59 {dimension_numbers = #tpu.dot_dimension_numbers<[1], [0], [0], [1], [0, 0, 1, 1], [], []>} : vector<8x128xf32>, vector<128x128xf32>, vector<8x128xf32> -> vector<8x128xf32>
    %113 = arith.addf %111, %112 : vector<8x128xf32>
    %114 = arith.addf %113, %7 : vector<8x128xf32>
    %115 = math.tanh %114 : vector<8x128xf32>
    %c8_i32 = arith.constant 8 : i32
    %c0_60 = arith.constant 0 : index
    %c0_61 = arith.constant 0 : index
    %116 = vector.load %arg8[%c0_60, %c0_61] : memref<128x128xf32, #tpu.memory_space<vmem>>, vector<128x128xf32>
    %cst_62 = arith.constant dense<0.000000e+00> : vector<8x128xf32>
    %117 = tpu.matmul %115, %116, %cst_62 {dimension_numbers = #tpu.dot_dimension_numbers<[1], [0], [0], [1], [0, 0, 1, 1], [], []>} : vector<8x128xf32>, vector<128x128xf32>, vector<8x128xf32> -> vector<8x128xf32>
    %c0_63 = arith.constant 0 : index
    %c0_64 = arith.constant 0 : index
    %118 = vector.load %arg9[%c0_63, %c0_64] : memref<1x128xf32, #tpu.memory_space<vmem>>, vector<1x128xf32>
    %119 = vector.broadcast %118 : vector<1x128xf32> to vector<8x128xf32>
    %120 = arith.addf %117, %119 : vector<8x128xf32>
    %c0_65 = arith.constant 0 : index
    %c0_66 = arith.constant 0 : index
    %121 = vector.load %arg12[%c0_65, %c0_66] : memref<8x128xf32, #tpu.memory_space<vmem>>, vector<8x128xf32>
    tpu.vector_store %arg12[%c0_65, %c0_66], %120 {strides = array<i32>} : memref<8x128xf32, #tpu.memory_space<vmem>>, vector<8x128xf32>,
    %c0_67 = arith.constant 0 : index
    %c0_68 = arith.constant 0 : index
    %122 = vector.load %arg10[%c0_67, %c0_68] : memref<128x128xf32, #tpu.memory_space<vmem>>, vector<128x128xf32>
    %cst_69 = arith.constant dense<0.000000e+00> : vector<8x128xf32>
    %123 = tpu.matmul %120, %122, %cst_69 {dimension_numbers = #tpu.dot_dimension_numbers<[1], [0], [0], [1], [0, 0, 1, 1], [], []>} : vector<8x128xf32>, vector<128x128xf32>, vector<8x128xf32> -> vector<8x128xf32>
    %c0_70 = arith.constant 0 : index
    %c0_71 = arith.constant 0 : index
    %124 = vector.load %arg11[%c0_70, %c0_71] : memref<1x128xf32, #tpu.memory_space<vmem>>, vector<1x128xf32>
    %125 = vector.broadcast %124 : vector<1x128xf32> to vector<8x128xf32>
    %126 = arith.addf %123, %125 : vector<8x128xf32>
    %c0_72 = arith.constant 0 : index
    %c0_73 = arith.constant 0 : index
    %127 = vector.load %arg13[%c0_72, %c0_73] : memref<8x128xf32, #tpu.memory_space<vmem>>, vector<8x128xf32>
    tpu.vector_store %arg13[%c0_72, %c0_73], %126 {strides = array<i32>} : memref<8x128xf32, #tpu.memory_space<vmem>>, vector<8x128xf32>,
    return
  }
  func.func @transform_0(%arg0: i32) -> (i32, i32, i32) {
    %c0_i32 = arith.constant 0 : i32
    %c0_i32_0 = arith.constant 0 : i32
    %c0_i32_1 = arith.constant 0 : i32
    return %c0_i32, %arg0, %c0_i32_0 : i32, i32, i32
  }
  func.func @transform_1(%arg0: i32) -> (i32, i32) {
    %c0_i32 = arith.constant 0 : i32
    %c0_i32_0 = arith.constant 0 : i32
    %c0_i32_1 = arith.constant 0 : i32
    return %c0_i32, %c0_i32_0 : i32, i32
  }
  func.func @transform_2(%arg0: i32) -> (i32, i32) {
    %c0_i32 = arith.constant 0 : i32
    %c0_i32_0 = arith.constant 0 : i32
    %c0_i32_1 = arith.constant 0 : i32
    return %c0_i32, %c0_i32_0 : i32, i32
  }
  func.func @transform_3(%arg0: i32) -> (i32, i32) {
    %c0_i32 = arith.constant 0 : i32
    %c0_i32_0 = arith.constant 0 : i32
    %c0_i32_1 = arith.constant 0 : i32
    return %c0_i32, %c0_i32_0 : i32, i32
  }
  func.func @transform_4(%arg0: i32) -> (i32, i32) {
    %c0_i32 = arith.constant 0 : i32
    %c0_i32_0 = arith.constant 0 : i32
    %c0_i32_1 = arith.constant 0 : i32
    return %c0_i32, %c0_i32_0 : i32, i32
  }
  func.func @transform_5(%arg0: i32) -> (i32, i32) {
    %c0_i32 = arith.constant 0 : i32
    %c0_i32_0 = arith.constant 0 : i32
    %c0_i32_1 = arith.constant 0 : i32
    return %c0_i32, %c0_i32_0 : i32, i32
  }
  func.func @transform_6(%arg0: i32) -> (i32, i32) {
    %c0_i32 = arith.constant 0 : i32
    %c0_i32_0 = arith.constant 0 : i32
    %c0_i32_1 = arith.constant 0 : i32
    return %c0_i32, %c0_i32_0 : i32, i32
  }
  func.func @transform_7(%arg0: i32) -> (i32, i32) {
    %c0_i32 = arith.constant 0 : i32
    %c0_i32_0 = arith.constant 0 : i32
    %c0_i32_1 = arith.constant 0 : i32
    return %c0_i32, %c0_i32_0 : i32, i32
  }
  func.func @transform_8(%arg0: i32) -> (i32, i32) {
    %c0_i32 = arith.constant 0 : i32
    %c0_i32_0 = arith.constant 0 : i32
    %c0_i32_1 = arith.constant 0 : i32
    return %c0_i32, %c0_i32_0 : i32, i32
  }
  func.func @transform_9(%arg0: i32) -> (i32, i32) {
    %c0_i32 = arith.constant 0 : i32
    %c0_i32_0 = arith.constant 0 : i32
    %c0_i32_1 = arith.constant 0 : i32
    return %c0_i32, %c0_i32_0 : i32, i32
  }
  func.func @transform_10(%arg0: i32) -> (i32, i32) {
    %c0_i32 = arith.constant 0 : i32
    %c0_i32_0 = arith.constant 0 : i32
    %c0_i32_1 = arith.constant 0 : i32
    return %c0_i32, %c0_i32_0 : i32, i32
  }
  func.func @transform_11(%arg0: i32) -> (i32, i32) {
    %c0_i32 = arith.constant 0 : i32
    %c0_i32_0 = arith.constant 0 : i32
    return %arg0, %c0_i32 : i32, i32
  }
  func.func @transform_12(%arg0: i32) -> (i32, i32) {
    %c0_i32 = arith.constant 0 : i32
    %c0_i32_0 = arith.constant 0 : i32
    return %arg0, %c0_i32 : i32, i32
  }
}

</mosaic_0001>

<llo_original>
// kernel: tpu_custom_call.1
$region0: #{tpu_custom_call.1}
  #allocation0 [shape = 'u32[]', space=smem, size = 0x4, offset = 0x4, fixed_abs, tag = 'smem constant byte address 0x4 - core index']
  #allocation1 [shape = 'u32[72,128]{1,0:T(1,128)}', space=vmem, size = 0x9000, scoped, tag = 'internal scratch']
  %s0 = inlined_call_operand.hbm [shape: f32[8,8,128], index: 0, kind: input, shape index: {}]
  %s1 = inlined_call_operand.hbm [shape: f32[128,128], index: 1, kind: input, shape index: {}]
  %s2 = inlined_call_operand.hbm [shape: f32[128,128], index: 2, kind: input, shape index: {}]
  %s3 = inlined_call_operand.vmem [shape: f32[1,128], index: 3, kind: input, shape index: {}]
  %s4 = inlined_call_operand.hbm [shape: f32[128,128], index: 4, kind: input, shape index: {}]
  %s5 = inlined_call_operand.hbm [shape: f32[128,128], index: 5, kind: input, shape index: {}]
  %s6 = inlined_call_operand.vmem [shape: f32[1,128], index: 6, kind: input, shape index: {}]
  %s7 = inlined_call_operand.hbm [shape: f32[128,128], index: 7, kind: input, shape index: {}]
  %s8 = inlined_call_operand.vmem [shape: f32[1,128], index: 8, kind: input, shape index: {}]
  %s9 = inlined_call_operand.hbm [shape: f32[128,128], index: 9, kind: input, shape index: {}]
  %s10 = inlined_call_operand.vmem [shape: f32[1,128], index: 10, kind: input, shape index: {}]
  %s11 = inlined_call_operand.hbm [shape: f32[8,128], index: 11, kind: output, shape index: {0}]
  %s12 = inlined_call_operand.hbm [shape: f32[8,128], index: 12, kind: output, shape index: {1}]
  %13 = xla_tuple %s11, %s12
  %s14 = sld [smem:[#allocation0]]
  $region90: #{tpu_custom_call.1} parent=0
    _
  %s16 = ssub.s32 1, %s14
  %s17 = scalar_select 0, %s16, %s14
  $region1: #{tpu_custom_call.1} parent=0
    #allocation2 [shape = 'u8[32768]{0}', space=vmem, size = 0x8000, scoped, tag = 'input window, operand 0, single buffered']
    #allocation3 [shape = 's32[1]{0}', space=sflag, size = 0x4, scoped, tag = 'scoped memory for tpu_custom_call.1']
    #allocation4 [shape = 's32[1]{0}', space=sflag, size = 0x4, scoped, tag = 'scoped memory for tpu_custom_call.1']
    #allocation5 [shape = 'u8[65536]{0}', space=vmem, size = 0x10000, scoped, tag = 'input window, operand 1, single buffered']
    #allocation6 [shape = 's32[1]{0}', space=sflag, size = 0x4, scoped, tag = 'scoped memory for tpu_custom_call.1']
    #allocation7 [shape = 'u8[65536]{0}', space=vmem, size = 0x10000, scoped, tag = 'input window, operand 2, single buffered']
    #allocation8 [shape = 'u8[65536]{0}', space=vmem, size = 0x10000, scoped, tag = 'input window, operand 4, single buffered']
    #allocation9 [shape = 's32[1]{0}', space=sflag, size = 0x4, scoped, tag = 'scoped memory for tpu_custom_call.1']
    #allocation10 [shape = 'u8[65536]{0}', space=vmem, size = 0x10000, scoped, tag = 'input window, operand 5, single buffered']
    #allocation11 [shape = 'u8[65536]{0}', space=vmem, size = 0x10000, scoped, tag = 'input window, operand 7, single buffered']
    #allocation12 [shape = 's32[1]{0}', space=sflag, size = 0x4, scoped, tag = 'scoped memory for tpu_custom_call.1']
    #allocation13 [shape = 'u8[65536]{0}', space=vmem, size = 0x10000, scoped, tag = 'input window, operand 9, single buffered']
    #allocation14 [shape = 'u8[4096]{0}', space=vmem, size = 0x1000, scoped, tag = 'output window, operand 0, single buffered']
    #allocation15 [shape = 'u8[4096]{0}', space=vmem, size = 0x1000, scoped, tag = 'output window, operand 1, single buffered']
    #allocation16 [shape = 's32[1]{0}', space=sflag, size = 0x4, scoped, tag = 'scoped memory for tpu_custom_call.1']
    %18 = vsyncpa [#allocation3], 0
    %19 = vsyncpa [#allocation6], 0
    %20 = vsyncpa [#allocation9], 0
    %21 = vsyncpa [#allocation12], 0
    %22 = vsyncpa [#allocation4], 0
    %23 = vsyncpa [#allocation16], 0
    // Predicated region
    $region2: #{tpu_custom_call.1} parent=1 // pred_check
      _
    $region3: #{tpu_custom_call.1} parent=1 // pred_check_branch
      %25 = sbr.rel (0) target = $region5
    $region4: #{tpu_custom_call.1} parent=1 // pred_region
      %27 = vsyncadd [#allocation3], 0
      %s28 = sshll.u32 %s0, 4
      %s29 = int_to_ptr.hbm [resolvable:$true] %s28
      %s30 = sshll.u32 [#allocation2], 4
      %s31 = int_to_ptr.vmem [resolvable:$true] %s30
      %36 = dma.hbm_to_vmem [thread:$0]  %s29, 1024, %s31, [#allocation3], 128, 128, 8
    $region5: #{tpu_custom_call.1} parent=1 // pred_fallthru
      _
    // Predicated region
    $region6: #{tpu_custom_call.1} parent=1 // pred_check
      _
    $region7: #{tpu_custom_call.1} parent=1 // pred_check_branch
      %38 = sbr.rel (0) target = $region9
    $region8: #{tpu_custom_call.1} parent=1 // pred_region
      %40 = vsyncadd [#allocation6], 0
      %s41 = sshll.u32 %s1, 4
      %s42 = int_to_ptr.hbm [resolvable:$true] %s41
      %s43 = sshll.u32 [#allocation5], 4
      %s44 = int_to_ptr.vmem [resolvable:$true] %s43
      %49 = dma.hbm_to_vmem [thread:$0]  %s42, 2048, %s44, [#allocation6], 128, 128, 8
    $region9: #{tpu_custom_call.1} parent=1 // pred_fallthru
      _
    // Predicated region
    $region10: #{tpu_custom_call.1} parent=1 // pred_check
      _
    $region11: #{tpu_custom_call.1} parent=1 // pred_check_branch
      %51 = sbr.rel (0) target = $region13
    $region12: #{tpu_custom_call.1} parent=1 // pred_region
      %53 = vsyncadd [#allocation6], 0
      %s54 = sshll.u32 %s2, 4
      %s55 = int_to_ptr.hbm [resolvable:$true] %s54
      %s56 = sshll.u32 [#allocation7], 4
      %s57 = int_to_ptr.vmem [resolvable:$true] %s56
      %62 = dma.hbm_to_vmem [thread:$0]  %s55, 2048, %s57, [#allocation6], 128, 128, 8
    $region13: #{tpu_custom_call.1} parent=1 // pred_fallthru
      _
    // Predicated region
    $region14: #{tpu_custom_call.1} parent=1 // pred_check
      _
    $region15: #{tpu_custom_call.1} parent=1 // pred_check_branch
      %64 = sbr.rel (0) target = $region17
    $region16: #{tpu_custom_call.1} parent=1 // pred_region
      _
    $region17: #{tpu_custom_call.1} parent=1 // pred_fallthru
      _
    // Predicated region
    $region18: #{tpu_custom_call.1} parent=1 // pred_check
      _
    $region19: #{tpu_custom_call.1} parent=1 // pred_check_branch
      %66 = sbr.rel (0) target = $region21
    $region20: #{tpu_custom_call.1} parent=1 // pred_region
      %68 = vsyncadd [#allocation9], 0
      %s69 = sshll.u32 %s4, 4
      %s70 = int_to_ptr.hbm [resolvable:$true] %s69
      %s71 = sshll.u32 [#allocation8], 4
      %s72 = int_to_ptr.vmem [resolvable:$true] %s71
      %77 = dma.hbm_to_vmem [thread:$0]  %s70, 2048, %s72, [#allocation9], 128, 128, 8
    $region21: #{tpu_custom_call.1} parent=1 // pred_fallthru
      _
    // Predicated region
    $region22: #{tpu_custom_call.1} parent=1 // pred_check
      _
    $region23: #{tpu_custom_call.1} parent=1 // pred_check_branch
      %79 = sbr.rel (0) target = $region25
    $region24: #{tpu_custom_call.1} parent=1 // pred_region
      %81 = vsyncadd [#allocation9], 0
      %s82 = sshll.u32 %s5, 4
      %s83 = int_to_ptr.hbm [resolvable:$true] %s82
      %s84 = sshll.u32 [#allocation10], 4
      %s85 = int_to_ptr.vmem [resolvable:$true] %s84
      %90 = dma.hbm_to_vmem [thread:$0]  %s83, 2048, %s85, [#allocation9], 128, 128, 8
    $region25: #{tpu_custom_call.1} parent=1 // pred_fallthru
      _
    // Predicated region
    $region26: #{tpu_custom_call.1} parent=1 // pred_check
      _
    $region27: #{tpu_custom_call.1} parent=1 // pred_check_branch
      %92 = sbr.rel (0) target = $region29
    $region28: #{tpu_custom_call.1} parent=1 // pred_region
      _
    $region29: #{tpu_custom_call.1} parent=1 // pred_fallthru
      _
    // Predicated region
    $region30: #{tpu_custom_call.1} parent=1 // pred_check
      _
    $region31: #{tpu_custom_call.1} parent=1 // pred_check_branch
      %94 = sbr.rel (0) target = $region33
    $region32: #{tpu_custom_call.1} parent=1 // pred_region
      %96 = vsyncadd [#allocation12], 0
      %s97 = sshll.u32 %s7, 4
      %s98 = int_to_ptr.hbm [resolvable:$true] %s97
      %s99 = sshll.u32 [#allocation11], 4
      %s100 = int_to_ptr.vmem [resolvable:$true] %s99
      %105 = dma.hbm_to_vmem [thread:$0]  %s98, 2048, %s100, [#allocation12], 128, 128, 8
    $region33: #{tpu_custom_call.1} parent=1 // pred_fallthru
      _
    // Predicated region
    $region34: #{tpu_custom_call.1} parent=1 // pred_check
      _
    $region35: #{tpu_custom_call.1} parent=1 // pred_check_branch
      %107 = sbr.rel (0) target = $region37
    $region36: #{tpu_custom_call.1} parent=1 // pred_region
      _
    $region37: #{tpu_custom_call.1} parent=1 // pred_fallthru
      _
    // Predicated region
    $region38: #{tpu_custom_call.1} parent=1 // pred_check
      _
    $region39: #{tpu_custom_call.1} parent=1 // pred_check_branch
      %109 = sbr.rel (0) target = $region41
    $region40: #{tpu_custom_call.1} parent=1 // pred_region
      %111 = vsyncadd [#allocation12], 0
      %s112 = sshll.u32 %s9, 4
      %s113 = int_to_ptr.hbm [resolvable:$true] %s112
      %s114 = sshll.u32 [#allocation13], 4
      %s115 = int_to_ptr.vmem [resolvable:$true] %s114
      %120 = dma.hbm_to_vmem [thread:$0]  %s113, 2048, %s115, [#allocation12], 128, 128, 8
    $region41: #{tpu_custom_call.1} parent=1 // pred_fallthru
      _
    // Predicated region
    $region42: #{tpu_custom_call.1} parent=1 // pred_check
      _
    $region43: #{tpu_custom_call.1} parent=1 // pred_check_branch
      %122 = sbr.rel (0) target = $region45
    $region44: #{tpu_custom_call.1} parent=1 // pred_region
      _
    $region45: #{tpu_custom_call.1} parent=1 // pred_fallthru
      _
    // Predicated region
    $region46: #{tpu_custom_call.1} parent=1 // pred_check
      _
    $region47: #{tpu_custom_call.1} parent=1 // pred_check_branch
      %124 = sbr.rel (0) target = $region49
    $region48: #{tpu_custom_call.1} parent=1 // pred_region
      %126 = dma.done [#allocation3], 1024
    $region49: #{tpu_custom_call.1} parent=1 // pred_fallthru
      _
    // Predicated region
    $region50: #{tpu_custom_call.1} parent=1 // pred_check
      _
    $region51: #{tpu_custom_call.1} parent=1 // pred_check_branch
      %128 = sbr.rel (0) target = $region53
    $region52: #{tpu_custom_call.1} parent=1 // pred_region
      %130 = dma.done [#allocation6], 2048
    $region53: #{tpu_custom_call.1} parent=1 // pred_fallthru
      _
    // Predicated region
    $region54: #{tpu_custom_call.1} parent=1 // pred_check
      _
    $region55: #{tpu_custom_call.1} parent=1 // pred_check_branch
      %132 = sbr.rel (0) target = $region57
    $region56: #{tpu_custom_call.1} parent=1 // pred_region
      %134 = dma.done [#allocation6], 2048
    $region57: #{tpu_custom_call.1} parent=1 // pred_fallthru
      _
    // Predicated region
    $region58: #{tpu_custom_call.1} parent=1 // pred_check
      _
    $region59: #{tpu_custom_call.1} parent=1 // pred_check_branch
      %136 = sbr.rel (0) target = $region61
    $region60: #{tpu_custom_call.1} parent=1 // pred_region
      %138 = dma.done [#allocation9], 2048
    $region61: #{tpu_custom_call.1} parent=1 // pred_fallthru
      _
    // Predicated region
    $region62: #{tpu_custom_call.1} parent=1 // pred_check
      _
    $region63: #{tpu_custom_call.1} parent=1 // pred_check_branch
      %140 = sbr.rel (0) target = $region65
    $region64: #{tpu_custom_call.1} parent=1 // pred_region
      %142 = dma.done [#allocation9], 2048
    $region65: #{tpu_custom_call.1} parent=1 // pred_fallthru
      _
    // Predicated region
    $region66: #{tpu_custom_call.1} parent=1 // pred_check
      _
    $region67: #{tpu_custom_call.1} parent=1 // pred_check_branch
      %144 = sbr.rel (0) target = $region69
    $region68: #{tpu_custom_call.1} parent=1 // pred_region
      %146 = dma.done [#allocation12], 2048
    $region69: #{tpu_custom_call.1} parent=1 // pred_fallthru
      _
    // Predicated region
    $region70: #{tpu_custom_call.1} parent=1 // pred_check
      _
    $region71: #{tpu_custom_call.1} parent=1 // pred_check_branch
      %148 = sbr.rel (0) target = $region73
    $region72: #{tpu_custom_call.1} parent=1 // pred_region
      %150 = dma.done [#allocation12], 2048
    $region73: #{tpu_custom_call.1} parent=1 // pred_fallthru
      _
    %v151 = vld [vmem:[%s3] sm:$0x1]
    %v153 = vperm.slane %v151, 0
    %v155 = vld [vmem:[#allocation5] sm:$0xff]
    %v156 = vld [vmem:[#allocation5 + $0x8] sm:$0xff]
    %v157 = vld [vmem:[#allocation5 + $0x10] sm:$0xff]
    %v158 = vld [vmem:[#allocation5 + $0x18] sm:$0xff]
    %v159 = vld [vmem:[#allocation5 + $0x20] sm:$0xff]
    %v160 = vld [vmem:[#allocation5 + $0x28] sm:$0xff]
    %v161 = vld [vmem:[#allocation5 + $0x30] sm:$0xff]
    %v162 = vld [vmem:[#allocation5 + $0x38] sm:$0xff]
    %v163 = vld [vmem:[#allocation5 + $0x40] sm:$0xff]
    %v164 = vld [vmem:[#allocation5 + $0x48] sm:$0xff]
    %v165 = vld [vmem:[#allocation5 + $0x50] sm:$0xff]
    %v166 = vld [vmem:[#allocation5 + $0x58] sm:$0xff]
    %v167 = vld [vmem:[#allocation5 + $0x60] sm:$0xff]
    %v168 = vld [vmem:[#allocation5 + $0x68] sm:$0xff]
    %v169 = vld [vmem:[#allocation5 + $0x70] sm:$0xff]
    %v170 = vld [vmem:[#allocation5 + $0x78] sm:$0xff]
    %v171 = vld [vmem:[#allocation7] sm:$0xff]
    %v172 = vld [vmem:[#allocation7 + $0x8] sm:$0xff]
    %v173 = vld [vmem:[#allocation7 + $0x10] sm:$0xff]
    %v174 = vld [vmem:[#allocation7 + $0x18] sm:$0xff]
    %v175 = vld [vmem:[#allocation7 + $0x20] sm:$0xff]
    %v176 = vld [vmem:[#allocation7 + $0x28] sm:$0xff]
    %v177 = vld [vmem:[#allocation7 + $0x30] sm:$0xff]
    %v178 = vld [vmem:[#allocation7 + $0x38] sm:$0xff]
    %v179 = vld [vmem:[#allocation7 + $0x40] sm:$0xff]
    %v180 = vld [vmem:[#allocation7 + $0x48] sm:$0xff]
    %v181 = vld [vmem:[#allocation7 + $0x50] sm:$0xff]
    %v182 = vld [vmem:[#allocation7 + $0x58] sm:$0xff]
    %v183 = vld [vmem:[#allocation7 + $0x60] sm:$0xff]
    %v184 = vld [vmem:[#allocation7 + $0x68] sm:$0xff]
    %v185 = vld [vmem:[#allocation7 + $0x70] sm:$0xff]
    %v186 = vld [vmem:[#allocation7 + $0x78] sm:$0xff]
    %v187 = vld [vmem:[%s6] sm:$0x1]
    %v189 = vperm.slane %v187, 0
    %v191 = vld [vmem:[#allocation8] sm:$0xff]
    %v192 = vld [vmem:[#allocation8 + $0x8] sm:$0xff]
    %v193 = vld [vmem:[#allocation8 + $0x10] sm:$0xff]
    %v194 = vld [vmem:[#allocation8 + $0x18] sm:$0xff]
    %v195 = vld [vmem:[#allocation8 + $0x20] sm:$0xff]
    %v196 = vld [vmem:[#allocation8 + $0x28] sm:$0xff]
    %v197 = vld [vmem:[#allocation8 + $0x30] sm:$0xff]
    %v198 = vld [vmem:[#allocation8 + $0x38] sm:$0xff]
    %v199 = vld [vmem:[#allocation8 + $0x40] sm:$0xff]
    %v200 = vld [vmem:[#allocation8 + $0x48] sm:$0xff]
    %v201 = vld [vmem:[#allocation8 + $0x50] sm:$0xff]
    %v202 = vld [vmem:[#allocation8 + $0x58] sm:$0xff]
    %v203 = vld [vmem:[#allocation8 + $0x60] sm:$0xff]
    %v204 = vld [vmem:[#allocation8 + $0x68] sm:$0xff]
    %v205 = vld [vmem:[#allocation8 + $0x70] sm:$0xff]
    %v206 = vld [vmem:[#allocation8 + $0x78] sm:$0xff]
    %v207 = vld [vmem:[#allocation10] sm:$0xff]
    %v208 = vld [vmem:[#allocation10 + $0x8] sm:$0xff]
    %v209 = vld [vmem:[#allocation10 + $0x10] sm:$0xff]
    %v210 = vld [vmem:[#allocation10 + $0x18] sm:$0xff]
    %v211 = vld [vmem:[#allocation10 + $0x20] sm:$0xff]
    %v212 = vld [vmem:[#allocation10 + $0x28] sm:$0xff]
    %v213 = vld [vmem:[#allocation10 + $0x30] sm:$0xff]
    %v214 = vld [vmem:[#allocation10 + $0x38] sm:$0xff]
    %v215 = vld [vmem:[#allocation10 + $0x40] sm:$0xff]
    %v216 = vld [vmem:[#allocation10 + $0x48] sm:$0xff]
    %v217 = vld [vmem:[#allocation10 + $0x50] sm:$0xff]
    %v218 = vld [vmem:[#allocation10 + $0x58] sm:$0xff]
    %v219 = vld [vmem:[#allocation10 + $0x60] sm:$0xff]
    %v220 = vld [vmem:[#allocation10 + $0x68] sm:$0xff]
    %v221 = vld [vmem:[#allocation10 + $0x70] sm:$0xff]
    %v222 = vld [vmem:[#allocation10 + $0x78] sm:$0xff]
    %v223 = vld [vmem:[#allocation2] sm:$0xff]
    %224 = vmatpush.msra.mxu0 %v186
    %225 = vmatpush.msra.mxu0 %v185
    %226 = vmatpush.msra.mxu0 %v184
    %227 = vmatpush.msra.mxu0 %v183
    %228 = vmatpush.msra.mxu0 %v182
    %229 = vmatpush.msra.mxu0 %v181
    %230 = vmatpush.msra.mxu0 %v180
    %231 = vmatpush.msra.mxu0 %v179
    %232 = vmatpush.msra.mxu0 %v178
    %233 = vmatpush.msra.mxu0 %v177
    %234 = vmatpush.msra.mxu0 %v176
    %235 = vmatpush.msra.mxu0 %v175
    %236 = vmatpush.msra.mxu0 %v174
    %237 = vmatpush.msra.mxu0 %v173
    %238 = vmatpush.msra.mxu0 %v172
    %239 = vmatpush.msra.mxu0 %v171
    %240 = vmatmul.f32.gmra.mxu0 0.0
    %v241 = vpop.f32.mrf.mxu0
    %v242 = vadd.f32 0.0, %v241
    %243 = vdwg.mxu0
    %244 = vmatpush.msra.mxu0 %v170
    %245 = vmatpush.msra.mxu0 %v169
    %246 = vmatpush.msra.mxu0 %v168
    %247 = vmatpush.msra.mxu0 %v167
    %248 = vmatpush.msra.mxu0 %v166
    %249 = vmatpush.msra.mxu0 %v165
    %250 = vmatpush.msra.mxu0 %v164
    %251 = vmatpush.msra.mxu0 %v163
    %252 = vmatpush.msra.mxu0 %v162
    %253 = vmatpush.msra.mxu0 %v161
    %254 = vmatpush.msra.mxu0 %v160
    %255 = vmatpush.msra.mxu0 %v159
    %256 = vmatpush.msra.mxu0 %v158
    %257 = vmatpush.msra.mxu0 %v157
    %258 = vmatpush.msra.mxu0 %v156
    %259 = vmatpush.msra.mxu0 %v155
    %260 = vmatmul.f32.gmra.mxu0 %v223
    %v261 = vpop.f32.mrf.mxu0
    %v262 = vadd.f32 %v242, %v261
    %263 = vdwg.mxu0
    %v264 = vadd.f32 %v262, %v153
    %v265 = vtanh.pop %v264
    %266 = vmatpush.msra.mxu0 %v222
    %267 = vmatpush.msra.mxu0 %v221
    %268 = vmatpush.msra.mxu0 %v220
    %269 = vmatpush.msra.mxu0 %v219
    %270 = vmatpush.msra.mxu0 %v218
    %271 = vmatpush.msra.mxu0 %v217
    %272 = vmatpush.msra.mxu0 %v216
    %273 = vmatpush.msra.mxu0 %v215
    %274 = vmatpush.msra.mxu0 %v214
    %275 = vmatpush.msra.mxu0 %v213
    %276 = vmatpush.msra.mxu0 %v212
    %277 = vmatpush.msra.mxu0 %v211
    %278 = vmatpush.msra.mxu0 %v210
    %279 = vmatpush.msra.mxu0 %v209
    %280 = vmatpush.msra.mxu0 %v208
    %281 = vmatpush.msra.mxu0 %v207
    %282 = vmatmul.f32.gmra.mxu0 0.0
    %v283 = vpop.f32.mrf.mxu0
    %v284 = vadd.f32 0.0, %v283
    %285 = vdwg.mxu0
    %286 = vmatpush.msra.mxu0 %v206
    %287 = vmatpush.msra.mxu0 %v205
    %288 = vmatpush.msra.mxu0 %v204
    %289 = vmatpush.msra.mxu0 %v203
    %290 = vmatpush.msra.mxu0 %v202
    %291 = vmatpush.msra.mxu0 %v201
    %292 = vmatpush.msra.mxu0 %v200
    %293 = vmatpush.msra.mxu0 %v199
    %294 = vmatpush.msra.mxu0 %v198
    %295 = vmatpush.msra.mxu0 %v197
    %296 = vmatpush.msra.mxu0 %v196
    %297 = vmatpush.msra.mxu0 %v195
    %298 = vmatpush.msra.mxu0 %v194
    %299 = vmatpush.msra.mxu0 %v193
    %300 = vmatpush.msra.mxu0 %v192
    %301 = vmatpush.msra.mxu0 %v191
    %302 = vmatmul.f32.gmra.mxu0 %v265
    %v303 = vpop.f32.mrf.mxu0
    %v304 = vadd.f32 %v284, %v303
    %305 = vdwg.mxu0
    %v306 = vadd.f32 %v304, %v189
    %v307 = vtanh.pop %v306
    %s308 = scalar_lea.vmem [#allocation2], 8
    %v309 = vld [vmem:[%s308] sm:$0xff]
    %310 = vmatpush.msra.mxu0 %v186
    %311 = vmatpush.msra.mxu0 %v185
    %312 = vmatpush.msra.mxu0 %v184
    %313 = vmatpush.msra.mxu0 %v183
    %314 = vmatpush.msra.mxu0 %v182
    %315 = vmatpush.msra.mxu0 %v181
    %316 = vmatpush.msra.mxu0 %v180
    %317 = vmatpush.msra.mxu0 %v179
    %318 = vmatpush.msra.mxu0 %v178
    %319 = vmatpush.msra.mxu0 %v177
    %320 = vmatpush.msra.mxu0 %v176
    %321 = vmatpush.msra.mxu0 %v175
    %322 = vmatpush.msra.mxu0 %v174
    %323 = vmatpush.msra.mxu0 %v173
    %324 = vmatpush.msra.mxu0 %v172
    %325 = vmatpush.msra.mxu0 %v171
    %326 = vmatmul.f32.gmra.mxu0 %v265
    %v327 = vpop.f32.mrf.mxu0
    %v328 = vadd.f32 0.0, %v327
    %329 = vdwg.mxu0
    %330 = vmatpush.msra.mxu0 %v170
    %331 = vmatpush.msra.mxu0 %v169
    %332 = vmatpush.msra.mxu0 %v168
    %333 = vmatpush.msra.mxu0 %v167
    %334 = vmatpush.msra.mxu0 %v166
    %335 = vmatpush.msra.mxu0 %v165
    %336 = vmatpush.msra.mxu0 %v164
    %337 = vmatpush.msra.mxu0 %v163
    %338 = vmatpush.msra.mxu0 %v162
    %339 = vmatpush.msra.mxu0 %v161
    %340 = vmatpush.msra.mxu0 %v160
    %341 = vmatpush.msra.mxu0 %v159
    %342 = vmatpush.msra.mxu0 %v158
    %343 = vmatpush.msra.mxu0 %v157
    %344 = vmatpush.msra.mxu0 %v156
    %345 = vmatpush.msra.mxu0 %v155
    %346 = vmatmul.f32.gmra.mxu0 %v309
    %v347 = vpop.f32.mrf.mxu0
    %v348 = vadd.f32 %v328, %v347
    %349 = vdwg.mxu0
    %v350 = vadd.f32 %v348, %v153
    %v351 = vtanh.pop %v350
    %352 = vmatpush.msra.mxu0 %v222
    %353 = vmatpush.msra.mxu0 %v221
    %354 = vmatpush.msra.mxu0 %v220
    %355 = vmatpush.msra.mxu0 %v219
    %356 = vmatpush.msra.mxu0 %v218
    %357 = vmatpush.msra.mxu0 %v217
    %358 = vmatpush.msra.mxu0 %v216
    %359 = vmatpush.msra.mxu0 %v215
    %360 = vmatpush.msra.mxu0 %v214
    %361 = vmatpush.msra.mxu0 %v213
    %362 = vmatpush.msra.mxu0 %v212
    %363 = vmatpush.msra.mxu0 %v211
    %364 = vmatpush.msra.mxu0 %v210
    %365 = vmatpush.msra.mxu0 %v209
    %366 = vmatpush.msra.mxu0 %v208
    %367 = vmatpush.msra.mxu0 %v207
    %368 = vmatmul.f32.gmra.mxu0 %v307
    %v369 = vpop.f32.mrf.mxu0
    %v370 = vadd.f32 0.0, %v369
    %371 = vdwg.mxu0
    %372 = vmatpush.msra.mxu0 %v206
    %373 = vmatpush.msra.mxu0 %v205
    %374 = vmatpush.msra.mxu0 %v204
    %375 = vmatpush.msra.mxu0 %v203
    %376 = vmatpush.msra.mxu0 %v202
    %377 = vmatpush.msra.mxu0 %v201
    %378 = vmatpush.msra.mxu0 %v200
    %379 = vmatpush.msra.mxu0 %v199
    %380 = vmatpush.msra.mxu0 %v198
    %381 = vmatpush.msra.mxu0 %v197
    %382 = vmatpush.msra.mxu0 %v196
    %383 = vmatpush.msra.mxu0 %v195
    %384 = vmatpush.msra.mxu0 %v194
    %385 = vmatpush.msra.mxu0 %v193
    %386 = vmatpush.msra.mxu0 %v192
    %387 = vmatpush.msra.mxu0 %v191
    %388 = vmatmul.f32.gmra.mxu0 %v351
    %v389 = vpop.f32.mrf.mxu0
    %v390 = vadd.f32 %v370, %v389
    %391 = vdwg.mxu0
    %v392 = vadd.f32 %v390, %v189
    %v393 = vtanh.pop %v392
    %s394 = scalar_lea.vmem [#allocation2], 16
    %v395 = vld [vmem:[%s394] sm:$0xff]
    %396 = vmatpush.msra.mxu0 %v186
    %397 = vmatpush.msra.mxu0 %v185
    %398 = vmatpush.msra.mxu0 %v184
    %399 = vmatpush.msra.mxu0 %v183
    %400 = vmatpush.msra.mxu0 %v182
    %401 = vmatpush.msra.mxu0 %v181
    %402 = vmatpush.msra.mxu0 %v180
    %403 = vmatpush.msra.mxu0 %v179
    %404 = vmatpush.msra.mxu0 %v178
    %405 = vmatpush.msra.mxu0 %v177
    %406 = vmatpush.msra.mxu0 %v176
    %407 = vmatpush.msra.mxu0 %v175
    %408 = vmatpush.msra.mxu0 %v174
    %409 = vmatpush.msra.mxu0 %v173
    %410 = vmatpush.msra.mxu0 %v172
    %411 = vmatpush.msra.mxu0 %v171
    %412 = vmatmul.f32.gmra.mxu0 %v351
    %v413 = vpop.f32.mrf.mxu0
    %v414 = vadd.f32 0.0, %v413
    %415 = vdwg.mxu0
    %416 = vmatpush.msra.mxu0 %v170
    %417 = vmatpush.msra.mxu0 %v169
    %418 = vmatpush.msra.mxu0 %v168
    %419 = vmatpush.msra.mxu0 %v167
    %420 = vmatpush.msra.mxu0 %v166
    %421 = vmatpush.msra.mxu0 %v165
    %422 = vmatpush.msra.mxu0 %v164
    %423 = vmatpush.msra.mxu0 %v163
    %424 = vmatpush.msra.mxu0 %v162
    %425 = vmatpush.msra.mxu0 %v161
    %426 = vmatpush.msra.mxu0 %v160
    %427 = vmatpush.msra.mxu0 %v159
    %428 = vmatpush.msra.mxu0 %v158
    %429 = vmatpush.msra.mxu0 %v157
    %430 = vmatpush.msra.mxu0 %v156
    %431 = vmatpush.msra.mxu0 %v155
    %432 = vmatmul.f32.gmra.mxu0 %v395
    %v433 = vpop.f32.mrf.mxu0
    %v434 = vadd.f32 %v414, %v433
    %435 = vdwg.mxu0
    %v436 = vadd.f32 %v434, %v153
    %v437 = vtanh.pop %v436
    %438 = vmatpush.msra.mxu0 %v222
    %439 = vmatpush.msra.mxu0 %v221
    %440 = vmatpush.msra.mxu0 %v220
    %441 = vmatpush.msra.mxu0 %v219
    %442 = vmatpush.msra.mxu0 %v218
    %443 = vmatpush.msra.mxu0 %v217
    %444 = vmatpush.msra.mxu0 %v216
    %445 = vmatpush.msra.mxu0 %v215
    %446 = vmatpush.msra.mxu0 %v214
    %447 = vmatpush.msra.mxu0 %v213
    %448 = vmatpush.msra.mxu0 %v212
    %449 = vmatpush.msra.mxu0 %v211
    %450 = vmatpush.msra.mxu0 %v210
    %451 = vmatpush.msra.mxu0 %v209
    %452 = vmatpush.msra.mxu0 %v208
    %453 = vmatpush.msra.mxu0 %v207
    %454 = vmatmul.f32.gmra.mxu0 %v393
    %v455 = vpop.f32.mrf.mxu0
    %v456 = vadd.f32 0.0, %v455
    %457 = vdwg.mxu0
    %458 = vmatpush.msra.mxu0 %v206
    %459 = vmatpush.msra.mxu0 %v205
    %460 = vmatpush.msra.mxu0 %v204
    %461 = vmatpush.msra.mxu0 %v203
    %462 = vmatpush.msra.mxu0 %v202
    %463 = vmatpush.msra.mxu0 %v201
    %464 = vmatpush.msra.mxu0 %v200
    %465 = vmatpush.msra.mxu0 %v199
    %466 = vmatpush.msra.mxu0 %v198
    %467 = vmatpush.msra.mxu0 %v197
    %468 = vmatpush.msra.mxu0 %v196
    %469 = vmatpush.msra.mxu0 %v195
    %470 = vmatpush.msra.mxu0 %v194
    %471 = vmatpush.msra.mxu0 %v193
    %472 = vmatpush.msra.mxu0 %v192
    %473 = vmatpush.msra.mxu0 %v191
    %474 = vmatmul.f32.gmra.mxu0 %v437
    %v475 = vpop.f32.mrf.mxu0
    %v476 = vadd.f32 %v456, %v475
    %477 = vdwg.mxu0
    %v478 = vadd.f32 %v476, %v189
    %v479 = vtanh.pop %v478
    %s480 = scalar_lea.vmem [#allocation2], 24
    %v481 = vld [vmem:[%s480] sm:$0xff]
    %482 = vmatpush.msra.mxu0 %v186
    %483 = vmatpush.msra.mxu0 %v185
    %484 = vmatpush.msra.mxu0 %v184
    %485 = vmatpush.msra.mxu0 %v183
    %486 = vmatpush.msra.mxu0 %v182
    %487 = vmatpush.msra.mxu0 %v181
    %488 = vmatpush.msra.mxu0 %v180
    %489 = vmatpush.msra.mxu0 %v179
    %490 = vmatpush.msra.mxu0 %v178
    %491 = vmatpush.msra.mxu0 %v177
    %492 = vmatpush.msra.mxu0 %v176
    %493 = vmatpush.msra.mxu0 %v175
    %494 = vmatpush.msra.mxu0 %v174
    %495 = vmatpush.msra.mxu0 %v173
    %496 = vmatpush.msra.mxu0 %v172
    %497 = vmatpush.msra.mxu0 %v171
    %498 = vmatmul.f32.gmra.mxu0 %v437
    %v499 = vpop.f32.mrf.mxu0
    %v500 = vadd.f32 0.0, %v499
    %501 = vdwg.mxu0
    %502 = vmatpush.msra.mxu0 %v170
    %503 = vmatpush.msra.mxu0 %v169
    %504 = vmatpush.msra.mxu0 %v168
    %505 = vmatpush.msra.mxu0 %v167
    %506 = vmatpush.msra.mxu0 %v166
    %507 = vmatpush.msra.mxu0 %v165
    %508 = vmatpush.msra.mxu0 %v164
    %509 = vmatpush.msra.mxu0 %v163
    %510 = vmatpush.msra.mxu0 %v162
    %511 = vmatpush.msra.mxu0 %v161
    %512 = vmatpush.msra.mxu0 %v160
    %513 = vmatpush.msra.mxu0 %v159
    %514 = vmatpush.msra.mxu0 %v158
    %515 = vmatpush.msra.mxu0 %v157
    %516 = vmatpush.msra.mxu0 %v156
    %517 = vmatpush.msra.mxu0 %v155
    %518 = vmatmul.f32.gmra.mxu0 %v481
    %v519 = vpop.f32.mrf.mxu0
    %v520 = vadd.f32 %v500, %v519
    %521 = vdwg.mxu0
    %v522 = vadd.f32 %v520, %v153
    %v523 = vtanh.pop %v522
    %524 = vmatpush.msra.mxu0 %v222
    %525 = vmatpush.msra.mxu0 %v221
    %526 = vmatpush.msra.mxu0 %v220
    %527 = vmatpush.msra.mxu0 %v219
    %528 = vmatpush.msra.mxu0 %v218
    %529 = vmatpush.msra.mxu0 %v217
    %530 = vmatpush.msra.mxu0 %v216
    %531 = vmatpush.msra.mxu0 %v215
    %532 = vmatpush.msra.mxu0 %v214
    %533 = vmatpush.msra.mxu0 %v213
    %534 = vmatpush.msra.mxu0 %v212
    %535 = vmatpush.msra.mxu0 %v211
    %536 = vmatpush.msra.mxu0 %v210
    %537 = vmatpush.msra.mxu0 %v209
    %538 = vmatpush.msra.mxu0 %v208
    %539 = vmatpush.msra.mxu0 %v207
    %540 = vmatmul.f32.gmra.mxu0 %v479
    %v541 = vpop.f32.mrf.mxu0
    %v542 = vadd.f32 0.0, %v541
    %543 = vdwg.mxu0
    %544 = vmatpush.msra.mxu0 %v206
    %545 = vmatpush.msra.mxu0 %v205
    %546 = vmatpush.msra.mxu0 %v204
    %547 = vmatpush.msra.mxu0 %v203
    %548 = vmatpush.msra.mxu0 %v202
    %549 = vmatpush.msra.mxu0 %v201
    %550 = vmatpush.msra.mxu0 %v200
    %551 = vmatpush.msra.mxu0 %v199
    %552 = vmatpush.msra.mxu0 %v198
    %553 = vmatpush.msra.mxu0 %v197
    %554 = vmatpush.msra.mxu0 %v196
    %555 = vmatpush.msra.mxu0 %v195
    %556 = vmatpush.msra.mxu0 %v194
    %557 = vmatpush.msra.mxu0 %v193
    %558 = vmatpush.msra.mxu0 %v192
    %559 = vmatpush.msra.mxu0 %v191
    %560 = vmatmul.f32.gmra.mxu0 %v523
    %v561 = vpop.f32.mrf.mxu0
    %v562 = vadd.f32 %v542, %v561
    %563 = vdwg.mxu0
    %v564 = vadd.f32 %v562, %v189
    %v565 = vtanh.pop %v564
    %s566 = scalar_lea.vmem [#allocation2], 32
    %v567 = vld [vmem:[%s566] sm:$0xff]
    %568 = vmatpush.msra.mxu0 %v186
    %569 = vmatpush.msra.mxu0 %v185
    %570 = vmatpush.msra.mxu0 %v184
    %571 = vmatpush.msra.mxu0 %v183
    %572 = vmatpush.msra.mxu0 %v182
    %573 = vmatpush.msra.mxu0 %v181
    %574 = vmatpush.msra.mxu0 %v180
    %575 = vmatpush.msra.mxu0 %v179
    %576 = vmatpush.msra.mxu0 %v178
    %577 = vmatpush.msra.mxu0 %v177
    %578 = vmatpush.msra.mxu0 %v176
    %579 = vmatpush.msra.mxu0 %v175
    %580 = vmatpush.msra.mxu0 %v174
    %581 = vmatpush.msra.mxu0 %v173
    %582 = vmatpush.msra.mxu0 %v172
    %583 = vmatpush.msra.mxu0 %v171
    %584 = vmatmul.f32.gmra.mxu0 %v523
    %v585 = vpop.f32.mrf.mxu0
    %v586 = vadd.f32 0.0, %v585
    %587 = vdwg.mxu0
    %588 = vmatpush.msra.mxu0 %v170
    %589 = vmatpush.msra.mxu0 %v169
    %590 = vmatpush.msra.mxu0 %v168
    %591 = vmatpush.msra.mxu0 %v167
    %592 = vmatpush.msra.mxu0 %v166
    %593 = vmatpush.msra.mxu0 %v165
    %594 = vmatpush.msra.mxu0 %v164
    %595 = vmatpush.msra.mxu0 %v163
    %596 = vmatpush.msra.mxu0 %v162
    %597 = vmatpush.msra.mxu0 %v161
    %598 = vmatpush.msra.mxu0 %v160
    %599 = vmatpush.msra.mxu0 %v159
    %600 = vmatpush.msra.mxu0 %v158
    %601 = vmatpush.msra.mxu0 %v157
    %602 = vmatpush.msra.mxu0 %v156
    %603 = vmatpush.msra.mxu0 %v155
    %604 = vmatmul.f32.gmra.mxu0 %v567
    %v605 = vpop.f32.mrf.mxu0
    %v606 = vadd.f32 %v586, %v605
    %607 = vdwg.mxu0
    %v608 = vadd.f32 %v606, %v153
    %v609 = vtanh.pop %v608
    %610 = vmatpush.msra.mxu0 %v222
    %611 = vmatpush.msra.mxu0 %v221
    %612 = vmatpush.msra.mxu0 %v220
    %613 = vmatpush.msra.mxu0 %v219
    %614 = vmatpush.msra.mxu0 %v218
    %615 = vmatpush.msra.mxu0 %v217
    %616 = vmatpush.msra.mxu0 %v216
    %617 = vmatpush.msra.mxu0 %v215
    %618 = vmatpush.msra.mxu0 %v214
    %619 = vmatpush.msra.mxu0 %v213
    %620 = vmatpush.msra.mxu0 %v212
    %621 = vmatpush.msra.mxu0 %v211
    %622 = vmatpush.msra.mxu0 %v210
    %623 = vmatpush.msra.mxu0 %v209
    %624 = vmatpush.msra.mxu0 %v208
    %625 = vmatpush.msra.mxu0 %v207
    %626 = vmatmul.f32.gmra.mxu0 %v565
    %v627 = vpop.f32.mrf.mxu0
    %v628 = vadd.f32 0.0, %v627
    %629 = vdwg.mxu0
    %630 = vmatpush.msra.mxu0 %v206
    %631 = vmatpush.msra.mxu0 %v205
    %632 = vmatpush.msra.mxu0 %v204
    %633 = vmatpush.msra.mxu0 %v203
    %634 = vmatpush.msra.mxu0 %v202
    %635 = vmatpush.msra.mxu0 %v201
    %636 = vmatpush.msra.mxu0 %v200
    %637 = vmatpush.msra.mxu0 %v199
    %638 = vmatpush.msra.mxu0 %v198
    %639 = vmatpush.msra.mxu0 %v197
    %640 = vmatpush.msra.mxu0 %v196
    %641 = vmatpush.msra.mxu0 %v195
    %642 = vmatpush.msra.mxu0 %v194
    %643 = vmatpush.msra.mxu0 %v193
    %644 = vmatpush.msra.mxu0 %v192
    %645 = vmatpush.msra.mxu0 %v191
    %646 = vmatmul.f32.gmra.mxu0 %v609
    %v647 = vpop.f32.mrf.mxu0
    %v648 = vadd.f32 %v628, %v647
    %649 = vdwg.mxu0
    %v650 = vadd.f32 %v648, %v189
    %v651 = vtanh.pop %v650
    %s652 = scalar_lea.vmem [#allocation2], 40
    %v653 = vld [vmem:[%s652] sm:$0xff]
    %654 = vmatpush.msra.mxu0 %v186
    %655 = vmatpush.msra.mxu0 %v185
    %656 = vmatpush.msra.mxu0 %v184
    %657 = vmatpush.msra.mxu0 %v183
    %658 = vmatpush.msra.mxu0 %v182
    %659 = vmatpush.msra.mxu0 %v181
    %660 = vmatpush.msra.mxu0 %v180
    %661 = vmatpush.msra.mxu0 %v179
    %662 = vmatpush.msra.mxu0 %v178
    %663 = vmatpush.msra.mxu0 %v177
    %664 = vmatpush.msra.mxu0 %v176
    %665 = vmatpush.msra.mxu0 %v175
    %666 = vmatpush.msra.mxu0 %v174
    %667 = vmatpush.msra.mxu0 %v173
    %668 = vmatpush.msra.mxu0 %v172
    %669 = vmatpush.msra.mxu0 %v171
    %670 = vmatmul.f32.gmra.mxu0 %v609
    %v671 = vpop.f32.mrf.mxu0
    %v672 = vadd.f32 0.0, %v671
    %673 = vdwg.mxu0
    %674 = vmatpush.msra.mxu0 %v170
    %675 = vmatpush.msra.mxu0 %v169
    %676 = vmatpush.msra.mxu0 %v168
    %677 = vmatpush.msra.mxu0 %v167
    %678 = vmatpush.msra.mxu0 %v166
    %679 = vmatpush.msra.mxu0 %v165
    %680 = vmatpush.msra.mxu0 %v164
    %681 = vmatpush.msra.mxu0 %v163
    %682 = vmatpush.msra.mxu0 %v162
    %683 = vmatpush.msra.mxu0 %v161
    %684 = vmatpush.msra.mxu0 %v160
    %685 = vmatpush.msra.mxu0 %v159
    %686 = vmatpush.msra.mxu0 %v158
    %687 = vmatpush.msra.mxu0 %v157
    %688 = vmatpush.msra.mxu0 %v156
    %689 = vmatpush.msra.mxu0 %v155
    %690 = vmatmul.f32.gmra.mxu0 %v653
    %v691 = vpop.f32.mrf.mxu0
    %v692 = vadd.f32 %v672, %v691
    %693 = vdwg.mxu0
    %v694 = vadd.f32 %v692, %v153
    %v695 = vtanh.pop %v694
    %696 = vmatpush.msra.mxu0 %v222
    %697 = vmatpush.msra.mxu0 %v221
    %698 = vmatpush.msra.mxu0 %v220
    %699 = vmatpush.msra.mxu0 %v219
    %700 = vmatpush.msra.mxu0 %v218
    %701 = vmatpush.msra.mxu0 %v217
    %702 = vmatpush.msra.mxu0 %v216
    %703 = vmatpush.msra.mxu0 %v215
    %704 = vmatpush.msra.mxu0 %v214
    %705 = vmatpush.msra.mxu0 %v213
    %706 = vmatpush.msra.mxu0 %v212
    %707 = vmatpush.msra.mxu0 %v211
    %708 = vmatpush.msra.mxu0 %v210
    %709 = vmatpush.msra.mxu0 %v209
    %710 = vmatpush.msra.mxu0 %v208
    %711 = vmatpush.msra.mxu0 %v207
    %712 = vmatmul.f32.gmra.mxu0 %v651
    %v713 = vpop.f32.mrf.mxu0
    %v714 = vadd.f32 0.0, %v713
    %715 = vdwg.mxu0
    %716 = vmatpush.msra.mxu0 %v206
    %717 = vmatpush.msra.mxu0 %v205
    %718 = vmatpush.msra.mxu0 %v204
    %719 = vmatpush.msra.mxu0 %v203
    %720 = vmatpush.msra.mxu0 %v202
    %721 = vmatpush.msra.mxu0 %v201
    %722 = vmatpush.msra.mxu0 %v200
    %723 = vmatpush.msra.mxu0 %v199
    %724 = vmatpush.msra.mxu0 %v198
    %725 = vmatpush.msra.mxu0 %v197
    %726 = vmatpush.msra.mxu0 %v196
    %727 = vmatpush.msra.mxu0 %v195
    %728 = vmatpush.msra.mxu0 %v194
    %729 = vmatpush.msra.mxu0 %v193
    %730 = vmatpush.msra.mxu0 %v192
    %731 = vmatpush.msra.mxu0 %v191
    %732 = vmatmul.f32.gmra.mxu0 %v695
    %v733 = vpop.f32.mrf.mxu0
    %v734 = vadd.f32 %v714, %v733
    %735 = vdwg.mxu0
    %v736 = vadd.f32 %v734, %v189
    %v737 = vtanh.pop %v736
    %s738 = scalar_lea.vmem [#allocation2], 48
    %v739 = vld [vmem:[%s738] sm:$0xff]
    %740 = vmatpush.msra.mxu0 %v186
    %741 = vmatpush.msra.mxu0 %v185
    %742 = vmatpush.msra.mxu0 %v184
    %743 = vmatpush.msra.mxu0 %v183
    %744 = vmatpush.msra.mxu0 %v182
    %745 = vmatpush.msra.mxu0 %v181
    %746 = vmatpush.msra.mxu0 %v180
    %747 = vmatpush.msra.mxu0 %v179
    %748 = vmatpush.msra.mxu0 %v178
    %749 = vmatpush.msra.mxu0 %v177
    %750 = vmatpush.msra.mxu0 %v176
    %751 = vmatpush.msra.mxu0 %v175
    %752 = vmatpush.msra.mxu0 %v174
    %753 = vmatpush.msra.mxu0 %v173
    %754 = vmatpush.msra.mxu0 %v172
    %755 = vmatpush.msra.mxu0 %v171
    %756 = vmatmul.f32.gmra.mxu0 %v695
    %v757 = vpop.f32.mrf.mxu0
    %v758 = vadd.f32 0.0, %v757
    %759 = vdwg.mxu0
    %760 = vmatpush.msra.mxu0 %v170
    %761 = vmatpush.msra.mxu0 %v169
    %762 = vmatpush.msra.mxu0 %v168
    %763 = vmatpush.msra.mxu0 %v167
    %764 = vmatpush.msra.mxu0 %v166
    %765 = vmatpush.msra.mxu0 %v165
    %766 = vmatpush.msra.mxu0 %v164
    %767 = vmatpush.msra.mxu0 %v163
    %768 = vmatpush.msra.mxu0 %v162
    %769 = vmatpush.msra.mxu0 %v161
    %770 = vmatpush.msra.mxu0 %v160
    %771 = vmatpush.msra.mxu0 %v159
    %772 = vmatpush.msra.mxu0 %v158
    %773 = vmatpush.msra.mxu0 %v157
    %774 = vmatpush.msra.mxu0 %v156
    %775 = vmatpush.msra.mxu0 %v155
    %776 = vmatmul.f32.gmra.mxu0 %v739
    %v777 = vpop.f32.mrf.mxu0
    %v778 = vadd.f32 %v758, %v777
    %779 = vdwg.mxu0
    %v780 = vadd.f32 %v778, %v153
    %v781 = vtanh.pop %v780
    %782 = vmatpush.msra.mxu0 %v222
    %783 = vmatpush.msra.mxu0 %v221
    %784 = vmatpush.msra.mxu0 %v220
    %785 = vmatpush.msra.mxu0 %v219
    %786 = vmatpush.msra.mxu0 %v218
    %787 = vmatpush.msra.mxu0 %v217
    %788 = vmatpush.msra.mxu0 %v216
    %789 = vmatpush.msra.mxu0 %v215
    %790 = vmatpush.msra.mxu0 %v214
    %791 = vmatpush.msra.mxu0 %v213
    %792 = vmatpush.msra.mxu0 %v212
    %793 = vmatpush.msra.mxu0 %v211
    %794 = vmatpush.msra.mxu0 %v210
    %795 = vmatpush.msra.mxu0 %v209
    %796 = vmatpush.msra.mxu0 %v208
    %797 = vmatpush.msra.mxu0 %v207
    %798 = vmatmul.f32.gmra.mxu0 %v737
    %v799 = vpop.f32.mrf.mxu0
    %v800 = vadd.f32 0.0, %v799
    %801 = vdwg.mxu0
    %802 = vmatpush.msra.mxu0 %v206
    %803 = vmatpush.msra.mxu0 %v205
    %804 = vmatpush.msra.mxu0 %v204
    %805 = vmatpush.msra.mxu0 %v203
    %806 = vmatpush.msra.mxu0 %v202
    %807 = vmatpush.msra.mxu0 %v201
    %808 = vmatpush.msra.mxu0 %v200
    %809 = vmatpush.msra.mxu0 %v199
    %810 = vmatpush.msra.mxu0 %v198
    %811 = vmatpush.msra.mxu0 %v197
    %812 = vmatpush.msra.mxu0 %v196
    %813 = vmatpush.msra.mxu0 %v195
    %814 = vmatpush.msra.mxu0 %v194
    %815 = vmatpush.msra.mxu0 %v193
    %816 = vmatpush.msra.mxu0 %v192
    %817 = vmatpush.msra.mxu0 %v191
    %818 = vmatmul.f32.gmra.mxu0 %v781
    %v819 = vpop.f32.mrf.mxu0
    %v820 = vadd.f32 %v800, %v819
    %821 = vdwg.mxu0
    %v822 = vadd.f32 %v820, %v189
    %v823 = vtanh.pop %v822
    %s824 = scalar_lea.vmem [#allocation2], 56
    %v825 = vld [vmem:[%s824] sm:$0xff]
    %826 = vmatpush.msra.mxu0 %v186
    %827 = vmatpush.msra.mxu0 %v185
    %828 = vmatpush.msra.mxu0 %v184
    %829 = vmatpush.msra.mxu0 %v183
    %830 = vmatpush.msra.mxu0 %v182
    %831 = vmatpush.msra.mxu0 %v181
    %832 = vmatpush.msra.mxu0 %v180
    %833 = vmatpush.msra.mxu0 %v179
    %834 = vmatpush.msra.mxu0 %v178
    %835 = vmatpush.msra.mxu0 %v177
    %836 = vmatpush.msra.mxu0 %v176
    %837 = vmatpush.msra.mxu0 %v175
    %838 = vmatpush.msra.mxu0 %v174
    %839 = vmatpush.msra.mxu0 %v173
    %840 = vmatpush.msra.mxu0 %v172
    %841 = vmatpush.msra.mxu0 %v171
    %842 = vmatmul.f32.gmra.mxu0 %v781
    %v843 = vpop.f32.mrf.mxu0
    %v844 = vadd.f32 0.0, %v843
    %845 = vdwg.mxu0
    %846 = vmatpush.msra.mxu0 %v170
    %847 = vmatpush.msra.mxu0 %v169
    %848 = vmatpush.msra.mxu0 %v168
    %849 = vmatpush.msra.mxu0 %v167
    %850 = vmatpush.msra.mxu0 %v166
    %851 = vmatpush.msra.mxu0 %v165
    %852 = vmatpush.msra.mxu0 %v164
    %853 = vmatpush.msra.mxu0 %v163
    %854 = vmatpush.msra.mxu0 %v162
    %855 = vmatpush.msra.mxu0 %v161
    %856 = vmatpush.msra.mxu0 %v160
    %857 = vmatpush.msra.mxu0 %v159
    %858 = vmatpush.msra.mxu0 %v158
    %859 = vmatpush.msra.mxu0 %v157
    %860 = vmatpush.msra.mxu0 %v156
    %861 = vmatpush.msra.mxu0 %v155
    %862 = vmatmul.f32.gmra.mxu0 %v825
    %v863 = vpop.f32.mrf.mxu0
    %v864 = vadd.f32 %v844, %v863
    %865 = vdwg.mxu0
    %v866 = vadd.f32 %v864, %v153
    %v867 = vtanh.pop %v866
    %868 = vmatpush.msra.mxu0 %v222
    %869 = vmatpush.msra.mxu0 %v221
    %870 = vmatpush.msra.mxu0 %v220
    %871 = vmatpush.msra.mxu0 %v219
    %872 = vmatpush.msra.mxu0 %v218
    %873 = vmatpush.msra.mxu0 %v217
    %874 = vmatpush.msra.mxu0 %v216
    %875 = vmatpush.msra.mxu0 %v215
    %876 = vmatpush.msra.mxu0 %v214
    %877 = vmatpush.msra.mxu0 %v213
    %878 = vmatpush.msra.mxu0 %v212
    %879 = vmatpush.msra.mxu0 %v211
    %880 = vmatpush.msra.mxu0 %v210
    %881 = vmatpush.msra.mxu0 %v209
    %882 = vmatpush.msra.mxu0 %v208
    %883 = vmatpush.msra.mxu0 %v207
    %884 = vmatmul.f32.gmra.mxu0 %v823
    %v885 = vpop.f32.mrf.mxu0
    %v886 = vadd.f32 0.0, %v885
    %887 = vdwg.mxu0
    %888 = vmatpush.msra.mxu0 %v206
    %889 = vmatpush.msra.mxu0 %v205
    %890 = vmatpush.msra.mxu0 %v204
    %891 = vmatpush.msra.mxu0 %v203
    %892 = vmatpush.msra.mxu0 %v202
    %893 = vmatpush.msra.mxu0 %v201
    %894 = vmatpush.msra.mxu0 %v200
    %895 = vmatpush.msra.mxu0 %v199
    %896 = vmatpush.msra.mxu0 %v198
    %897 = vmatpush.msra.mxu0 %v197
    %898 = vmatpush.msra.mxu0 %v196
    %899 = vmatpush.msra.mxu0 %v195
    %900 = vmatpush.msra.mxu0 %v194
    %901 = vmatpush.msra.mxu0 %v193
    %902 = vmatpush.msra.mxu0 %v192
    %903 = vmatpush.msra.mxu0 %v191
    %904 = vmatmul.f32.gmra.mxu0 %v867
    %v905 = vpop.f32.mrf.mxu0
    %v906 = vadd.f32 %v886, %v905
    %907 = vdwg.mxu0
    %v908 = vadd.f32 %v906, %v189
    %v909 = vtanh.pop %v908
    %v910 = vld [vmem:[#allocation11] sm:$0xff]
    %v911 = vld [vmem:[#allocation11 + $0x8] sm:$0xff]
    %v912 = vld [vmem:[#allocation11 + $0x10] sm:$0xff]
    %v913 = vld [vmem:[#allocation11 + $0x18] sm:$0xff]
    %v914 = vld [vmem:[#allocation11 + $0x20] sm:$0xff]
    %v915 = vld [vmem:[#allocation11 + $0x28] sm:$0xff]
    %v916 = vld [vmem:[#allocation11 + $0x30] sm:$0xff]
    %v917 = vld [vmem:[#allocation11 + $0x38] sm:$0xff]
    %v918 = vld [vmem:[#allocation11 + $0x40] sm:$0xff]
    %v919 = vld [vmem:[#allocation11 + $0x48] sm:$0xff]
    %v920 = vld [vmem:[#allocation11 + $0x50] sm:$0xff]
    %v921 = vld [vmem:[#allocation11 + $0x58] sm:$0xff]
    %v922 = vld [vmem:[#allocation11 + $0x60] sm:$0xff]
    %v923 = vld [vmem:[#allocation11 + $0x68] sm:$0xff]
    %v924 = vld [vmem:[#allocation11 + $0x70] sm:$0xff]
    %v925 = vld [vmem:[#allocation11 + $0x78] sm:$0xff]
    %v926 = vld [vmem:[%s8] sm:$0x1]
    %v928 = vperm.slane %v926, 0
    %930 = vmatpush.msra.mxu0 %v925
    %931 = vmatpush.msra.mxu0 %v924
    %932 = vmatpush.msra.mxu0 %v923
    %933 = vmatpush.msra.mxu0 %v922
    %934 = vmatpush.msra.mxu0 %v921
    %935 = vmatpush.msra.mxu0 %v920
    %936 = vmatpush.msra.mxu0 %v919
    %937 = vmatpush.msra.mxu0 %v918
    %938 = vmatpush.msra.mxu0 %v917
    %939 = vmatpush.msra.mxu0 %v916
    %940 = vmatpush.msra.mxu0 %v915
    %941 = vmatpush.msra.mxu0 %v914
    %942 = vmatpush.msra.mxu0 %v913
    %943 = vmatpush.msra.mxu0 %v912
    %944 = vmatpush.msra.mxu0 %v911
    %945 = vmatpush.msra.mxu0 %v910
    %946 = vmatmul.f32.gmra.mxu0 %v909
    %v947 = vpop.f32.mrf.mxu0
    %v948 = vadd.f32 %v928, %v947
    %949 = vdwg.mxu0
    %950 = vst [vmem:[#allocation14] sm:$0xff] %v948
    %v951 = vld [vmem:[#allocation13] sm:$0xff]
    %v952 = vld [vmem:[#allocation13 + $0x8] sm:$0xff]
    %v953 = vld [vmem:[#allocation13 + $0x10] sm:$0xff]
    %v954 = vld [vmem:[#allocation13 + $0x18] sm:$0xff]
    %v955 = vld [vmem:[#allocation13 + $0x20] sm:$0xff]
    %v956 = vld [vmem:[#allocation13 + $0x28] sm:$0xff]
    %v957 = vld [vmem:[#allocation13 + $0x30] sm:$0xff]
    %v958 = vld [vmem:[#allocation13 + $0x38] sm:$0xff]
    %v959 = vld [vmem:[#allocation13 + $0x40] sm:$0xff]
    %v960 = vld [vmem:[#allocation13 + $0x48] sm:$0xff]
    %v961 = vld [vmem:[#allocation13 + $0x50] sm:$0xff]
    %v962 = vld [vmem:[#allocation13 + $0x58] sm:$0xff]
    %v963 = vld [vmem:[#allocation13 + $0x60] sm:$0xff]
    %v964 = vld [vmem:[#allocation13 + $0x68] sm:$0xff]
    %v965 = vld [vmem:[#allocation13 + $0x70] sm:$0xff]
    %v966 = vld [vmem:[#allocation13 + $0x78] sm:$0xff]
    %v967 = vld [vmem:[%s10] sm:$0x1]
    %v969 = vperm.slane %v967, 0
    %971 = vmatpush.msra.mxu0 %v966
    %972 = vmatpush.msra.mxu0 %v965
    %973 = vmatpush.msra.mxu0 %v964
    %974 = vmatpush.msra.mxu0 %v963
    %975 = vmatpush.msra.mxu0 %v962
    %976 = vmatpush.msra.mxu0 %v961
    %977 = vmatpush.msra.mxu0 %v960
    %978 = vmatpush.msra.mxu0 %v959
    %979 = vmatpush.msra.mxu0 %v958
    %980 = vmatpush.msra.mxu0 %v957
    %981 = vmatpush.msra.mxu0 %v956
    %982 = vmatpush.msra.mxu0 %v955
    %983 = vmatpush.msra.mxu0 %v954
    %984 = vmatpush.msra.mxu0 %v953
    %985 = vmatpush.msra.mxu0 %v952
    %986 = vmatpush.msra.mxu0 %v951
    %987 = vmatmul.f32.gmra.mxu0 %v948
    %v988 = vpop.f32.mrf.mxu0
    %v989 = vadd.f32 %v969, %v988
    %990 = vdwg.mxu0
    %991 = vst [vmem:[#allocation15] sm:$0xff] %v989
    // Predicated region
    $region74: #{tpu_custom_call.1} parent=1 // pred_check
      _
    $region75: #{tpu_custom_call.1} parent=1 // pred_check_branch
      %993 = sbr.rel (0) target = $region77
    $region76: #{tpu_custom_call.1} parent=1 // pred_region
      %995 = vsyncadd [#allocation4], 0
      %s997 = sshll.u32 [#allocation14], 4
      %s998 = int_to_ptr.vmem [resolvable:$true] %s997
      %s999 = sshll.u32 %s11, 4
      %s1000 = int_to_ptr.hbm [resolvable:$true] %s999
      %1002 = dma.vmem_to_hbm [thread:$0]  %s998, 128, %s1000, [#allocation4]
    $region77: #{tpu_custom_call.1} parent=1 // pred_fallthru
      _
    // Predicated region
    $region78: #{tpu_custom_call.1} parent=1 // pred_check
      _
    $region79: #{tpu_custom_call.1} parent=1 // pred_check_branch
      %1004 = sbr.rel (0) target = $region81
    $region80: #{tpu_custom_call.1} parent=1 // pred_region
      %1006 = vsyncadd [#allocation16], 0
      %s1008 = sshll.u32 [#allocation15], 4
      %s1009 = int_to_ptr.vmem [resolvable:$true] %s1008
      %s1010 = sshll.u32 %s12, 4
      %s1011 = int_to_ptr.hbm [resolvable:$true] %s1010
      %1013 = dma.vmem_to_hbm [thread:$0]  %s1009, 128, %s1011, [#allocation16]
    $region81: #{tpu_custom_call.1} parent=1 // pred_fallthru
      _
    // Predicated region
    $region82: #{tpu_custom_call.1} parent=1 // pred_check
      _
    $region83: #{tpu_custom_call.1} parent=1 // pred_check_branch
      %1015 = sbr.rel (0) target = $region85
    $region84: #{tpu_custom_call.1} parent=1 // pred_region
      %1017 = dma.done [#allocation4], 128
    $region85: #{tpu_custom_call.1} parent=1 // pred_fallthru
      _
    // Predicated region
    $region86: #{tpu_custom_call.1} parent=1 // pred_check
      _
    $region87: #{tpu_custom_call.1} parent=1 // pred_check_branch
      %1019 = sbr.rel (0) target = $region89
    $region88: #{tpu_custom_call.1} parent=1 // pred_region
      %1021 = dma.done [#allocation16], 128
    $region89: #{tpu_custom_call.1} parent=1 // pred_fallthru
      _
    %1022 = vsyncpa [#allocation3], 1
    %1023 = vsyncpa [#allocation6], 1
    %1024 = vsyncpa [#allocation9], 1
    %1025 = vsyncpa [#allocation12], 1
    %1026 = vsyncpa [#allocation4], 1
    %1027 = vsyncpa [#allocation16], 1

</llo_original>
